<compile_context>
chip_gen: v6e
topology: v6e:2x2x1
jax: 0.10.0
libtpu: 0.0.40
codegen_flags: <defaults>
</compile_context>

<pallas_src>
import functools

import jax
import jax.numpy as jnp
from jax.experimental import pallas as pl
from jax.experimental.pallas import tpu as pltpu

_LANE = 128


def actor_net_kernel(xT_ref, w1_ref, b1_ref, w2_ref, b2_ref, w3_ref, b3_ref,
                     oT_ref, *, action_max):
    prec = jax.lax.Precision.HIGHEST  # full-f32 MXU passes (K<=32, essentially free)

    # clamp input; (S, TB) is lane-dense (TB is a multiple of 128)
    x = jnp.clip(xT_ref[...], -1.1, 1.1)
    # dense_layer_1 + relu: (H,S) @ (S,TB) -> (H,TB), bias (H,1) broadcasts along lanes
    h1 = jnp.dot(w1_ref[...], x, precision=prec,
                 preferred_element_type=jnp.float32) + b1_ref[...]
    h1 = jnp.maximum(h1, 0.0)
    # dense_layer_2 + relu: (H,H) @ (H,TB) -> (H,TB)
    h2 = jnp.dot(w2_ref[...], h1, precision=prec,
                 preferred_element_type=jnp.float32) + b2_ref[...]
    h2 = jnp.maximum(h2, 0.0)
    # output layer + tanh (EUP), scaled by action_max: (A,H) @ (H,TB) -> (A,TB)
    out = jnp.dot(w3_ref[...], h2, precision=prec,
                  preferred_element_type=jnp.float32) + b3_ref[...]
    oT_ref[...] = (jnp.tanh(out) * action_max).astype(oT_ref.dtype)


def _round_up(n, m):
    return ((n + m - 1) // m) * m


def _cdiv(a, b):
    return (a + b - 1) // b


def actor_net_forward(x, params, action_max, *, tb_max=8192):
    """x: (B, state_size) float32.

    params: PyTorch-layout weights (out_features, in_features) and biases
    (out_features, 1). Returns (B, action_size) float32.
    """
    w1, b1, w2, b2, w3, b3 = (params["w1"], params["b1"], params["w2"],
                              params["b2"], params["w3"], params["b3"])
    B, state_size = x.shape
    hidden_size = w1.shape[0]
    action_size = w3.shape[0]

    # --- Adaptive batch-tile selection (review items 2-4) ---------------------------
    # Batch sits on lanes now, so the tile quantum is 128.  Size TB from the step
    # count (minimal padding), and use at least 2 steps whenever there are >= 2
    # lane-tiles of work so both v7x TensorCores get grid steps.
    B_lane = _round_up(B, _LANE)
    min_steps = 2 if B_lane >= 2 * _LANE else 1
    n_steps = max(_cdiv(B_lane, tb_max), min_steps)
    TB = _round_up(_cdiv(B_lane, n_steps), _LANE)
    grid = _cdiv(B_lane, TB)
    B_pad = grid * TB

    # Transpose so batch lands on lanes, then pad the lane axis (<= ~127+grid*128-B
    # extra columns). Padded columns compute tanh(bias)-garbage that is sliced off.
    xT = jnp.pad(x.T, ((0, 0), (0, B_pad - B)))

    kernel = functools.partial(actor_net_kernel, action_max=float(action_max))

    outT = pl.pallas_call(
        kernel,
        out_shape=jax.ShapeDtypeStruct((action_size, B_pad), jnp.float32),
        grid_spec=pltpu.PrefetchScalarGridSpec(
            num_scalar_prefetch=0,
            grid=(grid,),
            in_specs=[
                # x streams per lane-dense batch tile (double-buffered by the pipeline).
                pl.BlockSpec((state_size, TB), lambda i: (0, i)),
                # Weights / biases: same block every grid step -> stay VMEM-resident.
                pl.BlockSpec((hidden_size, state_size), lambda i: (0, 0)),
                pl.BlockSpec((hidden_size, 1), lambda i: (0, 0)),
                pl.BlockSpec((hidden_size, hidden_size), lambda i: (0, 0)),
                pl.BlockSpec((hidden_size, 1), lambda i: (0, 0)),
                pl.BlockSpec((action_size, hidden_size), lambda i: (0, 0)),
                pl.BlockSpec((action_size, 1), lambda i: (0, 0)),
            ],
            out_specs=pl.BlockSpec((action_size, TB), lambda i: (0, i)),
        ),
        compiler_params=pltpu.CompilerParams(
            # Batch tiles are independent: shard across v7x's two TensorCores.
            # TODO(synk): verify on v7x that "parallel" actually core-shards the grid;
            # if not, switch to pltpu.CORE_PARALLEL or an explicit core_map mesh.
            dimension_semantics=("parallel",),
        ),
    )(xT, w1, b1, w2, b2, w3, b3)

    return outT[:, :B].T


def init_params(key, state_size, action_size, hidden_size):
    """Deterministic init mimicking nn.Linear default (uniform +-1/sqrt(fan_in)).
    Weights in PyTorch layout (out_features, in_features); biases (out_features, 1)."""
    ks = jax.random.split(key, 6)

    def linear(kw, kb, fan_in, fan_out):
        bound = 1.0 / jnp.sqrt(float(fan_in))
        w = jax.random.uniform(kw, (fan_out, fan_in), jnp.float32, -bound, bound)
        b = jax.random.uniform(kb, (fan_out, 1), jnp.float32, -bound, bound)
        return w, b

    w1, b1 = linear(ks[0], ks[1], state_size, hidden_size)
    w2, b2 = linear(ks[2], ks[3], hidden_size, hidden_size)
    w3, b3 = linear(ks[4], ks[5], hidden_size, action_size)
    return dict(w1=w1, b1=b1, w2=w2, b2=b2, w3=w3, b3=b3)


def _reference(x, params, action_max):
    prec = jax.lax.Precision.HIGHEST
    xc = jnp.clip(x, -1.1, 1.1)
    h1 = jax.nn.relu(jnp.dot(xc, params["w1"].T, precision=prec) + params["b1"].T)
    h2 = jax.nn.relu(jnp.dot(h1, params["w2"].T, precision=prec) + params["b2"].T)
    out = jnp.dot(h2, params["w3"].T, precision=prec) + params["b3"].T
    return jnp.tanh(out) * action_max


if __name__ == "__main__":
    # Small shapes consistent with the module's forward: x is (batch, state_size).
    batch = 8
    state_size = 8
    hidden_size = 32
    action_size = 4
    action_max = 2.0

    key = jax.random.PRNGKey(0)
    k_x, k_p, k_x2 = jax.random.split(key, 3)
    params = init_params(k_p, state_size, action_size, hidden_size)

    # 1) tiny batch: single 128-lane tile, single grid step.
    x = jax.random.normal(k_x, (batch, state_size), jnp.float32)
    out = jax.block_until_ready(actor_net_forward(x, params, action_max))
    ref = _reference(x, params, action_max)
    assert out.shape == (batch, action_size)
    assert jnp.allclose(out, ref, atol=1e-5, rtol=1e-5), \
        float(jnp.max(jnp.abs(out - ref)))

    # 2) larger, non-multiple-of-128 batch: exercises the multi-step grid (>= 2 steps
    #    for v7x megacore), weight residency, adaptive tile sizing, and pad/slice.
    big_batch = 1000
    x2 = jax.random.normal(k_x2, (big_batch, state_size), jnp.float32)
    out2 = jax.block_until_ready(actor_net_forward(x2, params, action_max))
    ref2 = _reference(x2, params, action_max)
    assert out2.shape == (big_batch, action_size)
    assert jnp.allclose(out2, ref2, atol=1e-5, rtol=1e-5), \
        float(jnp.max(jnp.abs(out2 - ref2)))

    print("KERNEL_OK")
</pallas_src>

<mosaic_0001>
module attributes {stable_mosaic.version = 11 : i64} {
  func.func @actor_net_kernel(%arg0: i32, %arg1: memref<8x128xf32, #tpu.memory_space<vmem>>, %arg2: memref<32x8xf32, #tpu.memory_space<vmem>>, %arg3: memref<32x1xf32, #tpu.memory_space<vmem>>, %arg4: memref<32x32xf32, #tpu.memory_space<vmem>>, %arg5: memref<32x1xf32, #tpu.memory_space<vmem>>, %arg6: memref<4x32xf32, #tpu.memory_space<vmem>>, %arg7: memref<4x1xf32, #tpu.memory_space<vmem>>, %arg8: memref<4x128xf32, #tpu.memory_space<vmem>>) attributes {dimension_semantics = [#tpu.dimension_semantics<parallel>], iteration_bounds = array<i64: 1>, scalar_prefetch = 0 : i64, scratch_operands = 0 : i64, tpu.core_type = #tpu.core_type<tc>, window_params = [{transform_indices = @transform_0, window_bounds = array<i64: 8, 128>}, {pipeline_mode = #tpu.pipeline_mode<synchronous>, transform_indices = @transform_1, window_bounds = array<i64: 32, 8>}, {pipeline_mode = #tpu.pipeline_mode<synchronous>, transform_indices = @transform_2, window_bounds = array<i64: 32, 1>}, {pipeline_mode = #tpu.pipeline_mode<synchronous>, transform_indices = @transform_3, window_bounds = array<i64: 32, 32>}, {pipeline_mode = #tpu.pipeline_mode<synchronous>, transform_indices = @transform_4, window_bounds = array<i64: 32, 1>}, {pipeline_mode = #tpu.pipeline_mode<synchronous>, transform_indices = @transform_5, window_bounds = array<i64: 4, 32>}, {pipeline_mode = #tpu.pipeline_mode<synchronous>, transform_indices = @transform_6, window_bounds = array<i64: 4, 1>}, {transform_indices = @transform_7, window_bounds = array<i64: 4, 128>}]} {
    %c0 = arith.constant 0 : index
    %c0_0 = arith.constant 0 : index
    %0 = vector.load %arg1[%c0, %c0_0] : memref<8x128xf32, #tpu.memory_space<vmem>>, vector<8x128xf32>
    %cst = arith.constant -1.100000e+00 : f32
    %cst_1 = arith.constant 1.100000e+00 : f32
    %1 = vector.broadcast %cst : f32 to vector<8x128xf32>
    %2 = arith.maximumf %1, %0 : vector<8x128xf32>
    %3 = vector.broadcast %cst_1 : f32 to vector<8x128xf32>
    %4 = arith.minimumf %3, %2 : vector<8x128xf32>
    %c0_2 = arith.constant 0 : index
    %c0_3 = arith.constant 0 : index
    %5 = vector.load %arg2[%c0_2, %c0_3] : memref<32x8xf32, #tpu.memory_space<vmem>>, vector<32x8xf32>
    %cst_4 = arith.constant dense<0.000000e+00> : vector<32x128xf32>
    %6 = tpu.matmul %5, %4, %cst_4 {dimension_numbers = #tpu.dot_dimension_numbers<[1], [0], [0], [1], [0, 0, 1, 1], [], []>, precision = #tpu.contract_precision<fp32>} : vector<32x8xf32>, vector<8x128xf32>, vector<32x128xf32> -> vector<32x128xf32>
    %c0_5 = arith.constant 0 : index
    %c0_6 = arith.constant 0 : index
    %7 = vector.load %arg3[%c0_5, %c0_6] : memref<32x1xf32, #tpu.memory_space<vmem>>, vector<32x1xf32>
    %8 = vector.broadcast %7 : vector<32x1xf32> to vector<32x128xf32>
    %9 = arith.addf %6, %8 : vector<32x128xf32>
    %cst_7 = arith.constant 0.000000e+00 : f32
    %10 = vector.broadcast %cst_7 : f32 to vector<32x128xf32>
    %11 = arith.maximumf %9, %10 : vector<32x128xf32>
    %c0_8 = arith.constant 0 : index
    %c0_9 = arith.constant 0 : index
    %12 = vector.load %arg4[%c0_8, %c0_9] : memref<32x32xf32, #tpu.memory_space<vmem>>, vector<32x32xf32>
    %cst_10 = arith.constant dense<0.000000e+00> : vector<32x128xf32>
    %13 = tpu.matmul %12, %11, %cst_10 {dimension_numbers = #tpu.dot_dimension_numbers<[1], [0], [0], [1], [0, 0, 1, 1], [], []>, precision = #tpu.contract_precision<fp32>} : vector<32x32xf32>, vector<32x128xf32>, vector<32x128xf32> -> vector<32x128xf32>
    %c0_11 = arith.constant 0 : index
    %c0_12 = arith.constant 0 : index
    %14 = vector.load %arg5[%c0_11, %c0_12] : memref<32x1xf32, #tpu.memory_space<vmem>>, vector<32x1xf32>
    %15 = vector.broadcast %14 : vector<32x1xf32> to vector<32x128xf32>
    %16 = arith.addf %13, %15 : vector<32x128xf32>
    %cst_13 = arith.constant 0.000000e+00 : f32
    %17 = vector.broadcast %cst_13 : f32 to vector<32x128xf32>
    %18 = arith.maximumf %16, %17 : vector<32x128xf32>
    %c0_14 = arith.constant 0 : index
    %c0_15 = arith.constant 0 : index
    %19 = vector.load %arg6[%c0_14, %c0_15] : memref<4x32xf32, #tpu.memory_space<vmem>>, vector<4x32xf32>
    %cst_16 = arith.constant dense<0.000000e+00> : vector<4x128xf32>
    %20 = tpu.matmul %19, %18, %cst_16 {dimension_numbers = #tpu.dot_dimension_numbers<[1], [0], [0], [1], [0, 0, 1, 1], [], []>, precision = #tpu.contract_precision<fp32>} : vector<4x32xf32>, vector<32x128xf32>, vector<4x128xf32> -> vector<4x128xf32>
    %c0_17 = arith.constant 0 : index
    %c0_18 = arith.constant 0 : index
    %21 = vector.load %arg7[%c0_17, %c0_18] : memref<4x1xf32, #tpu.memory_space<vmem>>, vector<4x1xf32>
    %22 = vector.broadcast %21 : vector<4x1xf32> to vector<4x128xf32>
    %23 = arith.addf %20, %22 : vector<4x128xf32>
    %24 = math.tanh %23 : vector<4x128xf32>
    %cst_19 = arith.constant 2.000000e+00 : f32
    %25 = vector.broadcast %cst_19 : f32 to vector<4x128xf32>
    %26 = arith.mulf %24, %25 : vector<4x128xf32>
    %c0_20 = arith.constant 0 : index
    %c0_21 = arith.constant 0 : index
    %27 = vector.load %arg8[%c0_20, %c0_21] : memref<4x128xf32, #tpu.memory_space<vmem>>, vector<4x128xf32>
    tpu.vector_store %arg8[%c0_20, %c0_21], %26 {strides = array<i32>} : memref<4x128xf32, #tpu.memory_space<vmem>>, vector<4x128xf32>,
    return
  }
  func.func @transform_0(%arg0: i32) -> (i32, i32) {
    %c0_i32 = arith.constant 0 : i32
    %c0_i32_0 = arith.constant 0 : i32
    return %c0_i32, %arg0 : i32, i32
  }
  func.func @transform_1(%arg0: i32) -> (i32, i32) {
    %c0_i32 = arith.constant 0 : i32
    %c0_i32_0 = arith.constant 0 : i32
    %c0_i32_1 = arith.constant 0 : i32
    return %c0_i32, %c0_i32_0 : i32, i32
  }
  func.func @transform_2(%arg0: i32) -> (i32, i32) {
    %c0_i32 = arith.constant 0 : i32
    %c0_i32_0 = arith.constant 0 : i32
    %c0_i32_1 = arith.constant 0 : i32
    return %c0_i32, %c0_i32_0 : i32, i32
  }
  func.func @transform_3(%arg0: i32) -> (i32, i32) {
    %c0_i32 = arith.constant 0 : i32
    %c0_i32_0 = arith.constant 0 : i32
    %c0_i32_1 = arith.constant 0 : i32
    return %c0_i32, %c0_i32_0 : i32, i32
  }
  func.func @transform_4(%arg0: i32) -> (i32, i32) {
    %c0_i32 = arith.constant 0 : i32
    %c0_i32_0 = arith.constant 0 : i32
    %c0_i32_1 = arith.constant 0 : i32
    return %c0_i32, %c0_i32_0 : i32, i32
  }
  func.func @transform_5(%arg0: i32) -> (i32, i32) {
    %c0_i32 = arith.constant 0 : i32
    %c0_i32_0 = arith.constant 0 : i32
    %c0_i32_1 = arith.constant 0 : i32
    return %c0_i32, %c0_i32_0 : i32, i32
  }
  func.func @transform_6(%arg0: i32) -> (i32, i32) {
    %c0_i32 = arith.constant 0 : i32
    %c0_i32_0 = arith.constant 0 : i32
    %c0_i32_1 = arith.constant 0 : i32
    return %c0_i32, %c0_i32_0 : i32, i32
  }
  func.func @transform_7(%arg0: i32) -> (i32, i32) {
    %c0_i32 = arith.constant 0 : i32
    %c0_i32_0 = arith.constant 0 : i32
    return %c0_i32, %arg0 : i32, i32
  }
}

</mosaic_0001>

<llo_original>
// kernel: tpu_custom_call.1
$region0: #{tpu_custom_call.1}
  #allocation0 [shape = 'u32[]', space=smem, size = 0x4, offset = 0x4, fixed_abs, tag = 'smem constant byte address 0x4 - core index']
  #allocation1 [shape = 'u32[144,128]{1,0:T(1,128)}', space=vmem, size = 0x12000, scoped, tag = 'internal scratch']
  %s0 = inlined_call_operand.vmem [shape: f32[8,128], index: 0, kind: input, shape index: {}]
  %s1 = inlined_call_operand.vmem [shape: f32[32,8], index: 1, kind: input, shape index: {}]
  %s2 = inlined_call_operand.vmem [shape: f32[32,1], index: 2, kind: input, shape index: {}]
  %s3 = inlined_call_operand.vmem [shape: f32[32,32], index: 3, kind: input, shape index: {}]
  %s4 = inlined_call_operand.vmem [shape: f32[32,1], index: 4, kind: input, shape index: {}]
  %s5 = inlined_call_operand.vmem [shape: f32[4,32], index: 5, kind: input, shape index: {}]
  %s6 = inlined_call_operand.vmem [shape: f32[4,1], index: 6, kind: input, shape index: {}]
  %s7 = inlined_call_operand.hbm [shape: f32[4,128], index: 7, kind: output, shape index: {}]
  %s8 = sld [smem:[#allocation0]]
  $region38: #{tpu_custom_call.1} parent=0
    _
  %s10 = ssub.s32 1, %s8
  %s11 = scalar_select 0, %s10, %s8
  $region1: #{tpu_custom_call.1} parent=0
    #allocation2 [shape = 'u8[2048]{0}', space=vmem, size = 0x800, scoped, tag = 'output window, operand 0, single buffered']
    #allocation3 [shape = 's32[1]{0}', space=sflag, size = 0x4, scoped, tag = 'scoped memory for tpu_custom_call.1']
    %12 = vsyncpa [#allocation3], 0
    // Predicated region
    $region2: #{tpu_custom_call.1} parent=1 // pred_check
      _
    $region3: #{tpu_custom_call.1} parent=1 // pred_check_branch
      %14 = sbr.rel (0) target = $region5
    $region4: #{tpu_custom_call.1} parent=1 // pred_region
      _
    $region5: #{tpu_custom_call.1} parent=1 // pred_fallthru
      _
    // Predicated region
    $region6: #{tpu_custom_call.1} parent=1 // pred_check
      _
    $region7: #{tpu_custom_call.1} parent=1 // pred_check_branch
      %16 = sbr.rel (0) target = $region9
    $region8: #{tpu_custom_call.1} parent=1 // pred_region
      _
    $region9: #{tpu_custom_call.1} parent=1 // pred_fallthru
      _
    // Predicated region
    $region10: #{tpu_custom_call.1} parent=1 // pred_check
      _
    $region11: #{tpu_custom_call.1} parent=1 // pred_check_branch
      %18 = sbr.rel (0) target = $region13
    $region12: #{tpu_custom_call.1} parent=1 // pred_region
      _
    $region13: #{tpu_custom_call.1} parent=1 // pred_fallthru
      _
    // Predicated region
    $region14: #{tpu_custom_call.1} parent=1 // pred_check
      _
    $region15: #{tpu_custom_call.1} parent=1 // pred_check_branch
      %20 = sbr.rel (0) target = $region17
    $region16: #{tpu_custom_call.1} parent=1 // pred_region
      _
    $region17: #{tpu_custom_call.1} parent=1 // pred_fallthru
      _
    // Predicated region
    $region18: #{tpu_custom_call.1} parent=1 // pred_check
      _
    $region19: #{tpu_custom_call.1} parent=1 // pred_check_branch
      %22 = sbr.rel (0) target = $region21
    $region20: #{tpu_custom_call.1} parent=1 // pred_region
      _
    $region21: #{tpu_custom_call.1} parent=1 // pred_fallthru
      _
    // Predicated region
    $region22: #{tpu_custom_call.1} parent=1 // pred_check
      _
    $region23: #{tpu_custom_call.1} parent=1 // pred_check_branch
      %24 = sbr.rel (0) target = $region25
    $region24: #{tpu_custom_call.1} parent=1 // pred_region
      _
    $region25: #{tpu_custom_call.1} parent=1 // pred_fallthru
      _
    // Predicated region
    $region26: #{tpu_custom_call.1} parent=1 // pred_check
      _
    $region27: #{tpu_custom_call.1} parent=1 // pred_check_branch
      %26 = sbr.rel (0) target = $region29
    $region28: #{tpu_custom_call.1} parent=1 // pred_region
      _
    $region29: #{tpu_custom_call.1} parent=1 // pred_fallthru
      _
    %v27 = vld [vmem:[%s0] sm:$0xff]
    %v28 = vmax.f32 %v27, -1.1
    %v29 = vmin.f32 %v28, 1.1
    %v30 = vld [vmem:[%s1] sm:$0xff]
    %v31 = vld [vmem:[%s1 + $0x8] sm:$0xff]
    %v32 = vld [vmem:[%s1 + $0x10] sm:$0xff]
    %v33 = vld [vmem:[%s1 + $0x18] sm:$0xff]
    %v34 = vld [vmem:[%s2] sm:$0xff]
    %v35 = vld [vmem:[%s2 + $0x8] sm:$0xff]
    %v36 = vld [vmem:[%s2 + $0x10] sm:$0xff]
    %v37 = vld [vmem:[%s2 + $0x18] sm:$0xff]
    %39 = vset.pattern.permute.xlu0 0
    %40 = vperm.xlu0 %39, %v34
    %v41 = vpop.permute.xlu0 %40
    %44 = vset.pattern.permute.xlu0 0
    %45 = vperm.xlu0 %44, %v35
    %v46 = vpop.permute.xlu0 %45
    %49 = vset.pattern.permute.xlu0 0
    %50 = vperm.xlu0 %49, %v36
    %v51 = vpop.permute.xlu0 %50
    %54 = vset.pattern.permute.xlu0 0
    %55 = vperm.xlu0 %54, %v37
    %v56 = vpop.permute.xlu0 %55
    %vm58 = vcmask 64512
    %v60 = vsel %vm58, %v30, 0
    %v63 = vsel %vm58, %v31, 0
    %v66 = vsel %vm58, %v32, 0
    %v69 = vsel %vm58, %v33, 0
    %71 = vmatprep.subr.mxu0 0.0
    %72 = vmatpush1.msra.mxu0 0.0
    %73 = vmatprep.subr.mxu0 0.0
    %74 = vmatpush1.msra.mxu0 0.0
    %75 = vmatprep.subr.mxu0 0.0
    %76 = vmatpush1.msra.mxu0 0.0
    %77 = vmatprep.subr.mxu0 0.0
    %78 = vmatpush1.msra.mxu0 0.0
    %79 = vmatprep.subr.mxu0 0.0
    %80 = vmatpush1.msra.mxu0 0.0
    %81 = vmatprep.subr.mxu0 0.0
    %82 = vmatpush1.msra.mxu0 0.0
    %83 = vmatprep.subr.mxu0 0.0
    %84 = vmatpush1.msra.mxu0 0.0
    %85 = vmatprep.subr.mxu0 0.0
    %86 = vmatpush1.msra.mxu0 0.0
    %87 = vmatprep.subr.mxu0 0.0
    %88 = vmatpush1.msra.mxu0 0.0
    %89 = vmatprep.subr.mxu0 0.0
    %90 = vmatpush1.msra.mxu0 0.0
    %91 = vmatprep.subr.mxu0 0.0
    %92 = vmatpush1.msra.mxu0 0.0
    %93 = vmatprep.subr.mxu0 0.0
    %94 = vmatpush1.msra.mxu0 0.0
    %95 = vmatprep.subr.mxu0 0.0
    %96 = vmatpush1.msra.mxu0 0.0
    %97 = vmatprep.subr.mxu0 0.0
    %98 = vmatpush1.msra.mxu0 0.0
    %99 = vmatprep.subr.mxu0 0.0
    %100 = vmatpush1.msra.mxu0 0.0
    %101 = vmatprep.subr.mxu0 0.0
    %v102 = vand.u32 %v29, 4294901760
    %103 = vmatpush1.msra.mxu0 %v102
    %104 = vmatprep.subr.mxu0 0.0
    %105 = vmatpush2.msra.mxu0 0.0
    %106 = vmatprep.subr.mxu0 0.0
    %107 = vmatpush2.msra.mxu0 0.0
    %108 = vmatprep.subr.mxu0 0.0
    %109 = vmatpush2.msra.mxu0 0.0
    %110 = vmatprep.subr.mxu0 0.0
    %111 = vmatpush2.msra.mxu0 0.0
    %112 = vmatprep.subr.mxu0 0.0
    %113 = vmatpush2.msra.mxu0 0.0
    %114 = vmatprep.subr.mxu0 0.0
    %115 = vmatpush2.msra.mxu0 0.0
    %116 = vmatprep.subr.mxu0 0.0
    %117 = vmatpush2.msra.mxu0 0.0
    %118 = vmatprep.subr.mxu0 0.0
    %119 = vmatpush2.msra.mxu0 0.0
    %120 = vmatprep.subr.mxu0 0.0
    %121 = vmatpush2.msra.mxu0 0.0
    %122 = vmatprep.subr.mxu0 0.0
    %123 = vmatpush2.msra.mxu0 0.0
    %124 = vmatprep.subr.mxu0 0.0
    %125 = vmatpush2.msra.mxu0 0.0
    %126 = vmatprep.subr.mxu0 0.0
    %127 = vmatpush2.msra.mxu0 0.0
    %128 = vmatprep.subr.mxu0 0.0
    %129 = vmatpush2.msra.mxu0 0.0
    %130 = vmatprep.subr.mxu0 0.0
    %131 = vmatpush2.msra.mxu0 0.0
    %132 = vmatprep.subr.mxu0 0.0
    %133 = vmatpush2.msra.mxu0 0.0
    %134 = vmatprep.subr.mxu0 0.0
    %135 = vmatpush2.msra.mxu0 0.0
    %136 = vmatprep.mubr.f32.mxu0 0.0
    %v137 = vand.u32 %v60, 4294901760
    %v138 = vsub.f32 %v60, %v137
    %v139 = vand.u32 %v138, 4294901760
    %v140 = vsub.f32 %v138, %v139
    %v141 = vand.u32 %v140, 4294901760
    %142 = vmatmul.mubr.f32.gmra.mxu0 %v141
    %v143 = vpop.f32.mrf.mxu0
    %v144 = vadd.f32 %v41, %v143
    %v145 = vpop.f32.mrf.mxu0
    %146 = vmatprep.mubr.f32.mxu0 0.0
    %v147 = vand.u32 %v63, 4294901760
    %v148 = vsub.f32 %v63, %v147
    %v149 = vand.u32 %v148, 4294901760
    %v150 = vsub.f32 %v148, %v149
    %v151 = vand.u32 %v150, 4294901760
    %152 = vmatmul.mubr.f32.gmra.mxu0 %v151
    %v153 = vpop.f32.mrf.mxu0
    %v154 = vadd.f32 %v46, %v153
    %v155 = vpop.f32.mrf.mxu0
    %156 = vmatprep.mubr.f32.mxu0 0.0
    %v157 = vand.u32 %v66, 4294901760
    %v158 = vsub.f32 %v66, %v157
    %v159 = vand.u32 %v158, 4294901760
    %v160 = vsub.f32 %v158, %v159
    %v161 = vand.u32 %v160, 4294901760
    %162 = vmatmul.mubr.f32.gmra.mxu0 %v161
    %v163 = vpop.f32.mrf.mxu0
    %v164 = vadd.f32 %v51, %v163
    %v165 = vpop.f32.mrf.mxu0
    %166 = vmatprep.mubr.f32.mxu0 0.0
    %v167 = vand.u32 %v69, 4294901760
    %v168 = vsub.f32 %v69, %v167
    %v169 = vand.u32 %v168, 4294901760
    %v170 = vsub.f32 %v168, %v169
    %v171 = vand.u32 %v170, 4294901760
    %172 = vmatmul.mubr.f32.gmra.mxu0 %v171
    %v173 = vpop.f32.mrf.mxu0
    %v174 = vadd.f32 %v56, %v173
    %v175 = vpop.f32.mrf.mxu0
    %176 = vdwg.mxu0
    %177 = vmatprep.subr.mxu0 0.0
    %178 = vmatpush1.msra.mxu0 0.0
    %179 = vmatprep.subr.mxu0 0.0
    %180 = vmatpush1.msra.mxu0 0.0
    %181 = vmatprep.subr.mxu0 0.0
    %182 = vmatpush1.msra.mxu0 0.0
    %183 = vmatprep.subr.mxu0 0.0
    %184 = vmatpush1.msra.mxu0 0.0
    %185 = vmatprep.subr.mxu0 0.0
    %186 = vmatpush1.msra.mxu0 0.0
    %187 = vmatprep.subr.mxu0 0.0
    %188 = vmatpush1.msra.mxu0 0.0
    %189 = vmatprep.subr.mxu0 0.0
    %190 = vmatpush1.msra.mxu0 0.0
    %191 = vmatprep.subr.mxu0 0.0
    %192 = vmatpush1.msra.mxu0 0.0
    %193 = vmatprep.subr.mxu0 0.0
    %194 = vmatpush1.msra.mxu0 0.0
    %195 = vmatprep.subr.mxu0 0.0
    %196 = vmatpush1.msra.mxu0 0.0
    %197 = vmatprep.subr.mxu0 0.0
    %198 = vmatpush1.msra.mxu0 0.0
    %199 = vmatprep.subr.mxu0 0.0
    %200 = vmatpush1.msra.mxu0 0.0
    %201 = vmatprep.subr.mxu0 0.0
    %202 = vmatpush1.msra.mxu0 0.0
    %203 = vmatprep.subr.mxu0 0.0
    %204 = vmatpush1.msra.mxu0 0.0
    %205 = vmatprep.subr.mxu0 0.0
    %206 = vmatpush1.msra.mxu0 0.0
    %207 = vmatprep.subr.mxu0 0.0
    %v208 = vand.u32 %v29, 4294901760
    %v209 = vsub.f32 %v29, %v208
    %v210 = vand.u32 %v209, 4294901760
    %v211 = vsub.f32 %v209, %v210
    %v212 = vand.u32 %v211, 4294901760
    %213 = vmatpush1.msra.mxu0 %v212
    %214 = vmatprep.subr.mxu0 0.0
    %215 = vmatpush2.msra.mxu0 0.0
    %216 = vmatprep.subr.mxu0 0.0
    %217 = vmatpush2.msra.mxu0 0.0
    %218 = vmatprep.subr.mxu0 0.0
    %219 = vmatpush2.msra.mxu0 0.0
    %220 = vmatprep.subr.mxu0 0.0
    %221 = vmatpush2.msra.mxu0 0.0
    %222 = vmatprep.subr.mxu0 0.0
    %223 = vmatpush2.msra.mxu0 0.0
    %224 = vmatprep.subr.mxu0 0.0
    %225 = vmatpush2.msra.mxu0 0.0
    %226 = vmatprep.subr.mxu0 0.0
    %227 = vmatpush2.msra.mxu0 0.0
    %228 = vmatprep.subr.mxu0 0.0
    %229 = vmatpush2.msra.mxu0 0.0
    %230 = vmatprep.subr.mxu0 0.0
    %231 = vmatpush2.msra.mxu0 0.0
    %232 = vmatprep.subr.mxu0 0.0
    %233 = vmatpush2.msra.mxu0 0.0
    %234 = vmatprep.subr.mxu0 0.0
    %235 = vmatpush2.msra.mxu0 0.0
    %236 = vmatprep.subr.mxu0 0.0
    %237 = vmatpush2.msra.mxu0 0.0
    %238 = vmatprep.subr.mxu0 0.0
    %239 = vmatpush2.msra.mxu0 0.0
    %240 = vmatprep.subr.mxu0 0.0
    %241 = vmatpush2.msra.mxu0 0.0
    %242 = vmatprep.subr.mxu0 0.0
    %243 = vmatpush2.msra.mxu0 0.0
    %244 = vmatprep.subr.mxu0 0.0
    %245 = vmatpush2.msra.mxu0 0.0
    %246 = vmatprep.mubr.f32.mxu0 0.0
    %v247 = vand.u32 %v60, 4294901760
    %248 = vmatmul.mubr.f32.gmra.mxu0 %v247
    %v249 = vpop.f32.mrf.mxu0
    %v250 = vadd.f32 %v144, %v249
    %v251 = vpop.f32.mrf.mxu0
    %252 = vmatprep.mubr.f32.mxu0 0.0
    %v253 = vand.u32 %v63, 4294901760
    %254 = vmatmul.mubr.f32.gmra.mxu0 %v253
    %v255 = vpop.f32.mrf.mxu0
    %v256 = vadd.f32 %v154, %v255
    %v257 = vpop.f32.mrf.mxu0
    %258 = vmatprep.mubr.f32.mxu0 0.0
    %v259 = vand.u32 %v66, 4294901760
    %260 = vmatmul.mubr.f32.gmra.mxu0 %v259
    %v261 = vpop.f32.mrf.mxu0
    %v262 = vadd.f32 %v164, %v261
    %v263 = vpop.f32.mrf.mxu0
    %264 = vmatprep.mubr.f32.mxu0 0.0
    %v265 = vand.u32 %v69, 4294901760
    %266 = vmatmul.mubr.f32.gmra.mxu0 %v265
    %v267 = vpop.f32.mrf.mxu0
    %v268 = vadd.f32 %v174, %v267
    %v269 = vpop.f32.mrf.mxu0
    %270 = vdwg.mxu0
    %271 = vmatprep.subr.mxu0 0.0
    %272 = vmatpush1.msra.mxu0 0.0
    %273 = vmatprep.subr.mxu0 0.0
    %274 = vmatpush1.msra.mxu0 0.0
    %275 = vmatprep.subr.mxu0 0.0
    %276 = vmatpush1.msra.mxu0 0.0
    %277 = vmatprep.subr.mxu0 0.0
    %278 = vmatpush1.msra.mxu0 0.0
    %279 = vmatprep.subr.mxu0 0.0
    %280 = vmatpush1.msra.mxu0 0.0
    %281 = vmatprep.subr.mxu0 0.0
    %282 = vmatpush1.msra.mxu0 0.0
    %283 = vmatprep.subr.mxu0 0.0
    %284 = vmatpush1.msra.mxu0 0.0
    %285 = vmatprep.subr.mxu0 0.0
    %286 = vmatpush1.msra.mxu0 0.0
    %287 = vmatprep.subr.mxu0 0.0
    %288 = vmatpush1.msra.mxu0 0.0
    %289 = vmatprep.subr.mxu0 0.0
    %290 = vmatpush1.msra.mxu0 0.0
    %291 = vmatprep.subr.mxu0 0.0
    %292 = vmatpush1.msra.mxu0 0.0
    %293 = vmatprep.subr.mxu0 0.0
    %294 = vmatpush1.msra.mxu0 0.0
    %295 = vmatprep.subr.mxu0 0.0
    %296 = vmatpush1.msra.mxu0 0.0
    %297 = vmatprep.subr.mxu0 0.0
    %298 = vmatpush1.msra.mxu0 0.0
    %299 = vmatprep.subr.mxu0 0.0
    %300 = vmatpush1.msra.mxu0 0.0
    %301 = vmatprep.subr.mxu0 0.0
    %v302 = vand.u32 %v29, 4294901760
    %v303 = vsub.f32 %v29, %v302
    %304 = vmatpush1.msra.mxu0 %v303
    %305 = vmatprep.subr.mxu0 0.0
    %306 = vmatpush2.msra.mxu0 0.0
    %307 = vmatprep.subr.mxu0 0.0
    %308 = vmatpush2.msra.mxu0 0.0
    %309 = vmatprep.subr.mxu0 0.0
    %310 = vmatpush2.msra.mxu0 0.0
    %311 = vmatprep.subr.mxu0 0.0
    %312 = vmatpush2.msra.mxu0 0.0
    %313 = vmatprep.subr.mxu0 0.0
    %314 = vmatpush2.msra.mxu0 0.0
    %315 = vmatprep.subr.mxu0 0.0
    %316 = vmatpush2.msra.mxu0 0.0
    %317 = vmatprep.subr.mxu0 0.0
    %318 = vmatpush2.msra.mxu0 0.0
    %319 = vmatprep.subr.mxu0 0.0
    %320 = vmatpush2.msra.mxu0 0.0
    %321 = vmatprep.subr.mxu0 0.0
    %322 = vmatpush2.msra.mxu0 0.0
    %323 = vmatprep.subr.mxu0 0.0
    %324 = vmatpush2.msra.mxu0 0.0
    %325 = vmatprep.subr.mxu0 0.0
    %326 = vmatpush2.msra.mxu0 0.0
    %327 = vmatprep.subr.mxu0 0.0
    %328 = vmatpush2.msra.mxu0 0.0
    %329 = vmatprep.subr.mxu0 0.0
    %330 = vmatpush2.msra.mxu0 0.0
    %331 = vmatprep.subr.mxu0 0.0
    %332 = vmatpush2.msra.mxu0 0.0
    %333 = vmatprep.subr.mxu0 0.0
    %334 = vmatpush2.msra.mxu0 0.0
    %335 = vmatprep.subr.mxu0 0.0
    %336 = vmatpush2.msra.mxu0 0.0
    %337 = vmatprep.mubr.f32.mxu0 0.0
    %v338 = vand.u32 %v60, 4294901760
    %v339 = vsub.f32 %v60, %v338
    %340 = vmatmul.mubr.f32.gmra.mxu0 %v339
    %v341 = vpop.f32.mrf.mxu0
    %v342 = vadd.f32 %v250, %v341
    %v343 = vpop.f32.mrf.mxu0
    %344 = vmatprep.mubr.f32.mxu0 0.0
    %v345 = vand.u32 %v63, 4294901760
    %v346 = vsub.f32 %v63, %v345
    %347 = vmatmul.mubr.f32.gmra.mxu0 %v346
    %v348 = vpop.f32.mrf.mxu0
    %v349 = vadd.f32 %v256, %v348
    %v350 = vpop.f32.mrf.mxu0
    %351 = vmatprep.mubr.f32.mxu0 0.0
    %v352 = vand.u32 %v66, 4294901760
    %v353 = vsub.f32 %v66, %v352
    %354 = vmatmul.mubr.f32.gmra.mxu0 %v353
    %v355 = vpop.f32.mrf.mxu0
    %v356 = vadd.f32 %v262, %v355
    %v357 = vpop.f32.mrf.mxu0
    %358 = vmatprep.mubr.f32.mxu0 0.0
    %v359 = vand.u32 %v69, 4294901760
    %v360 = vsub.f32 %v69, %v359
    %361 = vmatmul.mubr.f32.gmra.mxu0 %v360
    %v362 = vpop.f32.mrf.mxu0
    %v363 = vadd.f32 %v268, %v362
    %v364 = vpop.f32.mrf.mxu0
    %365 = vdwg.mxu0
    %366 = vmatprep.subr.mxu0 0.0
    %367 = vmatpush1.msra.mxu0 0.0
    %368 = vmatprep.subr.mxu0 0.0
    %369 = vmatpush1.msra.mxu0 0.0
    %370 = vmatprep.subr.mxu0 0.0
    %371 = vmatpush1.msra.mxu0 0.0
    %372 = vmatprep.subr.mxu0 0.0
    %373 = vmatpush1.msra.mxu0 0.0
    %374 = vmatprep.subr.mxu0 0.0
    %375 = vmatpush1.msra.mxu0 0.0
    %376 = vmatprep.subr.mxu0 0.0
    %377 = vmatpush1.msra.mxu0 0.0
    %378 = vmatprep.subr.mxu0 0.0
    %379 = vmatpush1.msra.mxu0 0.0
    %380 = vmatprep.subr.mxu0 0.0
    %381 = vmatpush1.msra.mxu0 0.0
    %382 = vmatprep.subr.mxu0 0.0
    %383 = vmatpush1.msra.mxu0 0.0
    %384 = vmatprep.subr.mxu0 0.0
    %385 = vmatpush1.msra.mxu0 0.0
    %386 = vmatprep.subr.mxu0 0.0
    %387 = vmatpush1.msra.mxu0 0.0
    %388 = vmatprep.subr.mxu0 0.0
    %389 = vmatpush1.msra.mxu0 0.0
    %390 = vmatprep.subr.mxu0 0.0
    %391 = vmatpush1.msra.mxu0 0.0
    %392 = vmatprep.subr.mxu0 0.0
    %393 = vmatpush1.msra.mxu0 0.0
    %394 = vmatprep.subr.mxu0 0.0
    %395 = vmatpush1.msra.mxu0 0.0
    %396 = vmatprep.subr.mxu0 0.0
    %v397 = vand.u32 %v29, 4294901760
    %398 = vmatpush1.msra.mxu0 %v397
    %399 = vmatprep.subr.mxu0 0.0
    %400 = vmatpush2.msra.mxu0 0.0
    %401 = vmatprep.subr.mxu0 0.0
    %402 = vmatpush2.msra.mxu0 0.0
    %403 = vmatprep.subr.mxu0 0.0
    %404 = vmatpush2.msra.mxu0 0.0
    %405 = vmatprep.subr.mxu0 0.0
    %406 = vmatpush2.msra.mxu0 0.0
    %407 = vmatprep.subr.mxu0 0.0
    %408 = vmatpush2.msra.mxu0 0.0
    %409 = vmatprep.subr.mxu0 0.0
    %410 = vmatpush2.msra.mxu0 0.0
    %411 = vmatprep.subr.mxu0 0.0
    %412 = vmatpush2.msra.mxu0 0.0
    %413 = vmatprep.subr.mxu0 0.0
    %414 = vmatpush2.msra.mxu0 0.0
    %415 = vmatprep.subr.mxu0 0.0
    %416 = vmatpush2.msra.mxu0 0.0
    %417 = vmatprep.subr.mxu0 0.0
    %418 = vmatpush2.msra.mxu0 0.0
    %419 = vmatprep.subr.mxu0 0.0
    %420 = vmatpush2.msra.mxu0 0.0
    %421 = vmatprep.subr.mxu0 0.0
    %422 = vmatpush2.msra.mxu0 0.0
    %423 = vmatprep.subr.mxu0 0.0
    %424 = vmatpush2.msra.mxu0 0.0
    %425 = vmatprep.subr.mxu0 0.0
    %426 = vmatpush2.msra.mxu0 0.0
    %427 = vmatprep.subr.mxu0 0.0
    %428 = vmatpush2.msra.mxu0 0.0
    %429 = vmatprep.subr.mxu0 0.0
    %430 = vmatpush2.msra.mxu0 0.0
    %431 = vmatprep.mubr.f32.mxu0 0.0
    %v432 = vand.u32 %v60, 4294901760
    %v433 = vsub.f32 %v60, %v432
    %v434 = vand.u32 %v433, 4294901760
    %435 = vmatmul.mubr.f32.gmra.mxu0 %v434
    %v436 = vpop.f32.mrf.mxu0
    %v437 = vadd.f32 %v342, %v436
    %v438 = vpop.f32.mrf.mxu0
    %439 = vmatprep.mubr.f32.mxu0 0.0
    %v440 = vand.u32 %v63, 4294901760
    %v441 = vsub.f32 %v63, %v440
    %v442 = vand.u32 %v441, 4294901760
    %443 = vmatmul.mubr.f32.gmra.mxu0 %v442
    %v444 = vpop.f32.mrf.mxu0
    %v445 = vadd.f32 %v349, %v444
    %v446 = vpop.f32.mrf.mxu0
    %447 = vmatprep.mubr.f32.mxu0 0.0
    %v448 = vand.u32 %v66, 4294901760
    %v449 = vsub.f32 %v66, %v448
    %v450 = vand.u32 %v449, 4294901760
    %451 = vmatmul.mubr.f32.gmra.mxu0 %v450
    %v452 = vpop.f32.mrf.mxu0
    %v453 = vadd.f32 %v356, %v452
    %v454 = vpop.f32.mrf.mxu0
    %455 = vmatprep.mubr.f32.mxu0 0.0
    %v456 = vand.u32 %v69, 4294901760
    %v457 = vsub.f32 %v69, %v456
    %v458 = vand.u32 %v457, 4294901760
    %459 = vmatmul.mubr.f32.gmra.mxu0 %v458
    %v460 = vpop.f32.mrf.mxu0
    %v461 = vadd.f32 %v363, %v460
    %v462 = vpop.f32.mrf.mxu0
    %463 = vdwg.mxu0
    %464 = vmatprep.subr.mxu0 0.0
    %465 = vmatpush1.msra.mxu0 0.0
    %466 = vmatprep.subr.mxu0 0.0
    %467 = vmatpush1.msra.mxu0 0.0
    %468 = vmatprep.subr.mxu0 0.0
    %469 = vmatpush1.msra.mxu0 0.0
    %470 = vmatprep.subr.mxu0 0.0
    %471 = vmatpush1.msra.mxu0 0.0
    %472 = vmatprep.subr.mxu0 0.0
    %473 = vmatpush1.msra.mxu0 0.0
    %474 = vmatprep.subr.mxu0 0.0
    %475 = vmatpush1.msra.mxu0 0.0
    %476 = vmatprep.subr.mxu0 0.0
    %477 = vmatpush1.msra.mxu0 0.0
    %478 = vmatprep.subr.mxu0 0.0
    %479 = vmatpush1.msra.mxu0 0.0
    %480 = vmatprep.subr.mxu0 0.0
    %481 = vmatpush1.msra.mxu0 0.0
    %482 = vmatprep.subr.mxu0 0.0
    %483 = vmatpush1.msra.mxu0 0.0
    %484 = vmatprep.subr.mxu0 0.0
    %485 = vmatpush1.msra.mxu0 0.0
    %486 = vmatprep.subr.mxu0 0.0
    %487 = vmatpush1.msra.mxu0 0.0
    %488 = vmatprep.subr.mxu0 0.0
    %489 = vmatpush1.msra.mxu0 0.0
    %490 = vmatprep.subr.mxu0 0.0
    %491 = vmatpush1.msra.mxu0 0.0
    %492 = vmatprep.subr.mxu0 0.0
    %493 = vmatpush1.msra.mxu0 0.0
    %494 = vmatprep.subr.mxu0 0.0
    %v495 = vand.u32 %v29, 4294901760
    %v496 = vsub.f32 %v29, %v495
    %v497 = vand.u32 %v496, 4294901760
    %498 = vmatpush1.msra.mxu0 %v497
    %499 = vmatprep.subr.mxu0 0.0
    %500 = vmatpush2.msra.mxu0 0.0
    %501 = vmatprep.subr.mxu0 0.0
    %502 = vmatpush2.msra.mxu0 0.0
    %503 = vmatprep.subr.mxu0 0.0
    %504 = vmatpush2.msra.mxu0 0.0
    %505 = vmatprep.subr.mxu0 0.0
    %506 = vmatpush2.msra.mxu0 0.0
    %507 = vmatprep.subr.mxu0 0.0
    %508 = vmatpush2.msra.mxu0 0.0
    %509 = vmatprep.subr.mxu0 0.0
    %510 = vmatpush2.msra.mxu0 0.0
    %511 = vmatprep.subr.mxu0 0.0
    %512 = vmatpush2.msra.mxu0 0.0
    %513 = vmatprep.subr.mxu0 0.0
    %514 = vmatpush2.msra.mxu0 0.0
    %515 = vmatprep.subr.mxu0 0.0
    %516 = vmatpush2.msra.mxu0 0.0
    %517 = vmatprep.subr.mxu0 0.0
    %518 = vmatpush2.msra.mxu0 0.0
    %519 = vmatprep.subr.mxu0 0.0
    %520 = vmatpush2.msra.mxu0 0.0
    %521 = vmatprep.subr.mxu0 0.0
    %522 = vmatpush2.msra.mxu0 0.0
    %523 = vmatprep.subr.mxu0 0.0
    %524 = vmatpush2.msra.mxu0 0.0
    %525 = vmatprep.subr.mxu0 0.0
    %526 = vmatpush2.msra.mxu0 0.0
    %527 = vmatprep.subr.mxu0 0.0
    %528 = vmatpush2.msra.mxu0 0.0
    %529 = vmatprep.subr.mxu0 0.0
    %530 = vmatpush2.msra.mxu0 0.0
    %531 = vmatprep.mubr.f32.mxu0 0.0
    %v532 = vand.u32 %v60, 4294901760
    %533 = vmatmul.mubr.f32.gmra.mxu0 %v532
    %v534 = vpop.f32.mrf.mxu0
    %v535 = vadd.f32 %v437, %v534
    %v536 = vpop.f32.mrf.mxu0
    %537 = vmatprep.mubr.f32.mxu0 0.0
    %v538 = vand.u32 %v63, 4294901760
    %539 = vmatmul.mubr.f32.gmra.mxu0 %v538
    %v540 = vpop.f32.mrf.mxu0
    %v541 = vadd.f32 %v445, %v540
    %v542 = vpop.f32.mrf.mxu0
    %543 = vmatprep.mubr.f32.mxu0 0.0
    %v544 = vand.u32 %v66, 4294901760
    %545 = vmatmul.mubr.f32.gmra.mxu0 %v544
    %v546 = vpop.f32.mrf.mxu0
    %v547 = vadd.f32 %v453, %v546
    %v548 = vpop.f32.mrf.mxu0
    %549 = vmatprep.mubr.f32.mxu0 0.0
    %v550 = vand.u32 %v69, 4294901760
    %551 = vmatmul.mubr.f32.gmra.mxu0 %v550
    %v552 = vpop.f32.mrf.mxu0
    %v553 = vadd.f32 %v461, %v552
    %v554 = vpop.f32.mrf.mxu0
    %555 = vdwg.mxu0
    %556 = vmatprep.subr.mxu0 0.0
    %557 = vmatpush1.msra.mxu0 0.0
    %558 = vmatprep.subr.mxu0 0.0
    %559 = vmatpush1.msra.mxu0 0.0
    %560 = vmatprep.subr.mxu0 0.0
    %561 = vmatpush1.msra.mxu0 0.0
    %562 = vmatprep.subr.mxu0 0.0
    %563 = vmatpush1.msra.mxu0 0.0
    %564 = vmatprep.subr.mxu0 0.0
    %565 = vmatpush1.msra.mxu0 0.0
    %566 = vmatprep.subr.mxu0 0.0
    %567 = vmatpush1.msra.mxu0 0.0
    %568 = vmatprep.subr.mxu0 0.0
    %569 = vmatpush1.msra.mxu0 0.0
    %570 = vmatprep.subr.mxu0 0.0
    %571 = vmatpush1.msra.mxu0 0.0
    %572 = vmatprep.subr.mxu0 0.0
    %573 = vmatpush1.msra.mxu0 0.0
    %574 = vmatprep.subr.mxu0 0.0
    %575 = vmatpush1.msra.mxu0 0.0
    %576 = vmatprep.subr.mxu0 0.0
    %577 = vmatpush1.msra.mxu0 0.0
    %578 = vmatprep.subr.mxu0 0.0
    %579 = vmatpush1.msra.mxu0 0.0
    %580 = vmatprep.subr.mxu0 0.0
    %581 = vmatpush1.msra.mxu0 0.0
    %582 = vmatprep.subr.mxu0 0.0
    %583 = vmatpush1.msra.mxu0 0.0
    %584 = vmatprep.subr.mxu0 0.0
    %585 = vmatpush1.msra.mxu0 0.0
    %586 = vmatprep.subr.mxu0 0.0
    %v587 = vand.u32 %v29, 4294901760
    %588 = vmatpush1.msra.mxu0 %v587
    %589 = vmatprep.subr.mxu0 0.0
    %590 = vmatpush2.msra.mxu0 0.0
    %591 = vmatprep.subr.mxu0 0.0
    %592 = vmatpush2.msra.mxu0 0.0
    %593 = vmatprep.subr.mxu0 0.0
    %594 = vmatpush2.msra.mxu0 0.0
    %595 = vmatprep.subr.mxu0 0.0
    %596 = vmatpush2.msra.mxu0 0.0
    %597 = vmatprep.subr.mxu0 0.0
    %598 = vmatpush2.msra.mxu0 0.0
    %599 = vmatprep.subr.mxu0 0.0
    %600 = vmatpush2.msra.mxu0 0.0
    %601 = vmatprep.subr.mxu0 0.0
    %602 = vmatpush2.msra.mxu0 0.0
    %603 = vmatprep.subr.mxu0 0.0
    %604 = vmatpush2.msra.mxu0 0.0
    %605 = vmatprep.subr.mxu0 0.0
    %606 = vmatpush2.msra.mxu0 0.0
    %607 = vmatprep.subr.mxu0 0.0
    %608 = vmatpush2.msra.mxu0 0.0
    %609 = vmatprep.subr.mxu0 0.0
    %610 = vmatpush2.msra.mxu0 0.0
    %611 = vmatprep.subr.mxu0 0.0
    %612 = vmatpush2.msra.mxu0 0.0
    %613 = vmatprep.subr.mxu0 0.0
    %614 = vmatpush2.msra.mxu0 0.0
    %615 = vmatprep.subr.mxu0 0.0
    %616 = vmatpush2.msra.mxu0 0.0
    %617 = vmatprep.subr.mxu0 0.0
    %618 = vmatpush2.msra.mxu0 0.0
    %619 = vmatprep.subr.mxu0 0.0
    %620 = vmatpush2.msra.mxu0 0.0
    %621 = vmatprep.mubr.f32.mxu0 0.0
    %v622 = vand.u32 %v60, 4294901760
    %623 = vmatmul.mubr.f32.gmra.mxu0 %v622
    %v624 = vpop.f32.mrf.mxu0
    %v625 = vadd.f32 %v535, %v624
    %v626 = vpop.f32.mrf.mxu0
    %627 = vmatprep.mubr.f32.mxu0 0.0
    %v628 = vand.u32 %v63, 4294901760
    %629 = vmatmul.mubr.f32.gmra.mxu0 %v628
    %v630 = vpop.f32.mrf.mxu0
    %v631 = vadd.f32 %v541, %v630
    %v632 = vpop.f32.mrf.mxu0
    %633 = vmatprep.mubr.f32.mxu0 0.0
    %v634 = vand.u32 %v66, 4294901760
    %635 = vmatmul.mubr.f32.gmra.mxu0 %v634
    %v636 = vpop.f32.mrf.mxu0
    %v637 = vadd.f32 %v547, %v636
    %v638 = vpop.f32.mrf.mxu0
    %639 = vmatprep.mubr.f32.mxu0 0.0
    %v640 = vand.u32 %v69, 4294901760
    %641 = vmatmul.mubr.f32.gmra.mxu0 %v640
    %v642 = vpop.f32.mrf.mxu0
    %v643 = vadd.f32 %v553, %v642
    %v644 = vpop.f32.mrf.mxu0
    %645 = vdwg.mxu0
    %v646 = vmax.f32 %v625, 0.0
    %v647 = vmax.f32 %v631, 0.0
    %v648 = vmax.f32 %v637, 0.0
    %v649 = vmax.f32 %v643, 0.0
    %v650 = vld [vmem:[%s3] sm:$0xff]
    %v651 = vld [vmem:[%s3 + $0x8] sm:$0xff]
    %v652 = vld [vmem:[%s3 + $0x10] sm:$0xff]
    %v653 = vld [vmem:[%s3 + $0x18] sm:$0xff]
    %v654 = vld [vmem:[%s4] sm:$0xff]
    %v655 = vld [vmem:[%s4 + $0x8] sm:$0xff]
    %v656 = vld [vmem:[%s4 + $0x10] sm:$0xff]
    %v657 = vld [vmem:[%s4 + $0x18] sm:$0xff]
    %659 = vset.pattern.permute.xlu0 0
    %660 = vperm.xlu0 %659, %v654
    %v661 = vpop.permute.xlu0 %660
    %664 = vset.pattern.permute.xlu0 0
    %665 = vperm.xlu0 %664, %v655
    %v666 = vpop.permute.xlu0 %665
    %669 = vset.pattern.permute.xlu0 0
    %670 = vperm.xlu0 %669, %v656
    %v671 = vpop.permute.xlu0 %670
    %674 = vset.pattern.permute.xlu0 0
    %675 = vperm.xlu0 %674, %v657
    %v676 = vpop.permute.xlu0 %675
    %vm678 = vcmask 261120
    %v680 = vsel %vm678, %v650, 0
    %v683 = vsel %vm678, %v651, 0
    %v686 = vsel %vm678, %v652, 0
    %v689 = vsel %vm678, %v653, 0
    %691 = vmatprep.subr.mxu0 0.0
    %692 = vmatpush1.msra.mxu0 0.0
    %693 = vmatprep.subr.mxu0 0.0
    %694 = vmatpush1.msra.mxu0 0.0
    %695 = vmatprep.subr.mxu0 0.0
    %696 = vmatpush1.msra.mxu0 0.0
    %697 = vmatprep.subr.mxu0 0.0
    %698 = vmatpush1.msra.mxu0 0.0
    %699 = vmatprep.subr.mxu0 0.0
    %700 = vmatpush1.msra.mxu0 0.0
    %701 = vmatprep.subr.mxu0 0.0
    %702 = vmatpush1.msra.mxu0 0.0
    %703 = vmatprep.subr.mxu0 0.0
    %704 = vmatpush1.msra.mxu0 0.0
    %705 = vmatprep.subr.mxu0 0.0
    %706 = vmatpush1.msra.mxu0 0.0
    %707 = vmatprep.subr.mxu0 0.0
    %708 = vmatpush1.msra.mxu0 0.0
    %709 = vmatprep.subr.mxu0 0.0
    %710 = vmatpush1.msra.mxu0 0.0
    %711 = vmatprep.subr.mxu0 0.0
    %712 = vmatpush1.msra.mxu0 0.0
    %713 = vmatprep.subr.mxu0 0.0
    %714 = vmatpush1.msra.mxu0 0.0
    %715 = vmatprep.subr.mxu0 0.0
    %v716 = vand.u32 %v649, 4294901760
    %717 = vmatpush1.msra.mxu0 %v716
    %718 = vmatprep.subr.mxu0 0.0
    %v719 = vand.u32 %v648, 4294901760
    %720 = vmatpush1.msra.mxu0 %v719
    %721 = vmatprep.subr.mxu0 0.0
    %v722 = vand.u32 %v647, 4294901760
    %723 = vmatpush1.msra.mxu0 %v722
    %724 = vmatprep.subr.mxu0 0.0
    %v725 = vand.u32 %v646, 4294901760
    %726 = vmatpush1.msra.mxu0 %v725
    %727 = vmatprep.subr.mxu0 0.0
    %728 = vmatpush2.msra.mxu0 0.0
    %729 = vmatprep.subr.mxu0 0.0
    %730 = vmatpush2.msra.mxu0 0.0
    %731 = vmatprep.subr.mxu0 0.0
    %732 = vmatpush2.msra.mxu0 0.0
    %733 = vmatprep.subr.mxu0 0.0
    %734 = vmatpush2.msra.mxu0 0.0
    %735 = vmatprep.subr.mxu0 0.0
    %736 = vmatpush2.msra.mxu0 0.0
    %737 = vmatprep.subr.mxu0 0.0
    %738 = vmatpush2.msra.mxu0 0.0
    %739 = vmatprep.subr.mxu0 0.0
    %740 = vmatpush2.msra.mxu0 0.0
    %741 = vmatprep.subr.mxu0 0.0
    %742 = vmatpush2.msra.mxu0 0.0
    %743 = vmatprep.subr.mxu0 0.0
    %744 = vmatpush2.msra.mxu0 0.0
    %745 = vmatprep.subr.mxu0 0.0
    %746 = vmatpush2.msra.mxu0 0.0
    %747 = vmatprep.subr.mxu0 0.0
    %748 = vmatpush2.msra.mxu0 0.0
    %749 = vmatprep.subr.mxu0 0.0
    %750 = vmatpush2.msra.mxu0 0.0
    %751 = vmatprep.subr.mxu0 0.0
    %752 = vmatpush2.msra.mxu0 0.0
    %753 = vmatprep.subr.mxu0 0.0
    %754 = vmatpush2.msra.mxu0 0.0
    %755 = vmatprep.subr.mxu0 0.0
    %756 = vmatpush2.msra.mxu0 0.0
    %757 = vmatprep.subr.mxu0 0.0
    %758 = vmatpush2.msra.mxu0 0.0
    %759 = vmatprep.mubr.f32.mxu0 0.0
    %v760 = vand.u32 %v680, 4294901760
    %v761 = vsub.f32 %v680, %v760
    %v762 = vand.u32 %v761, 4294901760
    %v763 = vsub.f32 %v761, %v762
    %v764 = vand.u32 %v763, 4294901760
    %765 = vmatmul.mubr.f32.gmra.mxu0 %v764
    %v766 = vpop.f32.mrf.mxu0
    %v767 = vadd.f32 %v661, %v766
    %v768 = vpop.f32.mrf.mxu0
    %769 = vmatprep.mubr.f32.mxu0 0.0
    %v770 = vand.u32 %v683, 4294901760
    %v771 = vsub.f32 %v683, %v770
    %v772 = vand.u32 %v771, 4294901760
    %v773 = vsub.f32 %v771, %v772
    %v774 = vand.u32 %v773, 4294901760
    %775 = vmatmul.mubr.f32.gmra.mxu0 %v774
    %v776 = vpop.f32.mrf.mxu0
    %v777 = vadd.f32 %v666, %v776
    %v778 = vpop.f32.mrf.mxu0
    %779 = vmatprep.mubr.f32.mxu0 0.0
    %v780 = vand.u32 %v686, 4294901760
    %v781 = vsub.f32 %v686, %v780
    %v782 = vand.u32 %v781, 4294901760
    %v783 = vsub.f32 %v781, %v782
    %v784 = vand.u32 %v783, 4294901760
    %785 = vmatmul.mubr.f32.gmra.mxu0 %v784
    %v786 = vpop.f32.mrf.mxu0
    %v787 = vadd.f32 %v671, %v786
    %v788 = vpop.f32.mrf.mxu0
    %789 = vmatprep.mubr.f32.mxu0 0.0
    %v790 = vand.u32 %v689, 4294901760
    %v791 = vsub.f32 %v689, %v790
    %v792 = vand.u32 %v791, 4294901760
    %v793 = vsub.f32 %v791, %v792
    %v794 = vand.u32 %v793, 4294901760
    %795 = vmatmul.mubr.f32.gmra.mxu0 %v794
    %v796 = vpop.f32.mrf.mxu0
    %v797 = vadd.f32 %v676, %v796
    %v798 = vpop.f32.mrf.mxu0
    %799 = vdwg.mxu0
    %800 = vmatprep.subr.mxu0 0.0
    %801 = vmatpush1.msra.mxu0 0.0
    %802 = vmatprep.subr.mxu0 0.0
    %803 = vmatpush1.msra.mxu0 0.0
    %804 = vmatprep.subr.mxu0 0.0
    %805 = vmatpush1.msra.mxu0 0.0
    %806 = vmatprep.subr.mxu0 0.0
    %807 = vmatpush1.msra.mxu0 0.0
    %808 = vmatprep.subr.mxu0 0.0
    %809 = vmatpush1.msra.mxu0 0.0
    %810 = vmatprep.subr.mxu0 0.0
    %811 = vmatpush1.msra.mxu0 0.0
    %812 = vmatprep.subr.mxu0 0.0
    %813 = vmatpush1.msra.mxu0 0.0
    %814 = vmatprep.subr.mxu0 0.0
    %815 = vmatpush1.msra.mxu0 0.0
    %816 = vmatprep.subr.mxu0 0.0
    %817 = vmatpush1.msra.mxu0 0.0
    %818 = vmatprep.subr.mxu0 0.0
    %819 = vmatpush1.msra.mxu0 0.0
    %820 = vmatprep.subr.mxu0 0.0
    %821 = vmatpush1.msra.mxu0 0.0
    %822 = vmatprep.subr.mxu0 0.0
    %823 = vmatpush1.msra.mxu0 0.0
    %824 = vmatprep.subr.mxu0 0.0
    %v825 = vand.u32 %v649, 4294901760
    %v826 = vsub.f32 %v649, %v825
    %v827 = vand.u32 %v826, 4294901760
    %v828 = vsub.f32 %v826, %v827
    %v829 = vand.u32 %v828, 4294901760
    %830 = vmatpush1.msra.mxu0 %v829
    %831 = vmatprep.subr.mxu0 0.0
    %v832 = vand.u32 %v648, 4294901760
    %v833 = vsub.f32 %v648, %v832
    %v834 = vand.u32 %v833, 4294901760
    %v835 = vsub.f32 %v833, %v834
    %v836 = vand.u32 %v835, 4294901760
    %837 = vmatpush1.msra.mxu0 %v836
    %838 = vmatprep.subr.mxu0 0.0
    %v839 = vand.u32 %v647, 4294901760
    %v840 = vsub.f32 %v647, %v839
    %v841 = vand.u32 %v840, 4294901760
    %v842 = vsub.f32 %v840, %v841
    %v843 = vand.u32 %v842, 4294901760
    %844 = vmatpush1.msra.mxu0 %v843
    %845 = vmatprep.subr.mxu0 0.0
    %v846 = vand.u32 %v646, 4294901760
    %v847 = vsub.f32 %v646, %v846
    %v848 = vand.u32 %v847, 4294901760
    %v849 = vsub.f32 %v847, %v848
    %v850 = vand.u32 %v849, 4294901760
    %851 = vmatpush1.msra.mxu0 %v850
    %852 = vmatprep.subr.mxu0 0.0
    %853 = vmatpush2.msra.mxu0 0.0
    %854 = vmatprep.subr.mxu0 0.0
    %855 = vmatpush2.msra.mxu0 0.0
    %856 = vmatprep.subr.mxu0 0.0
    %857 = vmatpush2.msra.mxu0 0.0
    %858 = vmatprep.subr.mxu0 0.0
    %859 = vmatpush2.msra.mxu0 0.0
    %860 = vmatprep.subr.mxu0 0.0
    %861 = vmatpush2.msra.mxu0 0.0
    %862 = vmatprep.subr.mxu0 0.0
    %863 = vmatpush2.msra.mxu0 0.0
    %864 = vmatprep.subr.mxu0 0.0
    %865 = vmatpush2.msra.mxu0 0.0
    %866 = vmatprep.subr.mxu0 0.0
    %867 = vmatpush2.msra.mxu0 0.0
    %868 = vmatprep.subr.mxu0 0.0
    %869 = vmatpush2.msra.mxu0 0.0
    %870 = vmatprep.subr.mxu0 0.0
    %871 = vmatpush2.msra.mxu0 0.0
    %872 = vmatprep.subr.mxu0 0.0
    %873 = vmatpush2.msra.mxu0 0.0
    %874 = vmatprep.subr.mxu0 0.0
    %875 = vmatpush2.msra.mxu0 0.0
    %876 = vmatprep.subr.mxu0 0.0
    %877 = vmatpush2.msra.mxu0 0.0
    %878 = vmatprep.subr.mxu0 0.0
    %879 = vmatpush2.msra.mxu0 0.0
    %880 = vmatprep.subr.mxu0 0.0
    %881 = vmatpush2.msra.mxu0 0.0
    %882 = vmatprep.subr.mxu0 0.0
    %883 = vmatpush2.msra.mxu0 0.0
    %884 = vmatprep.mubr.f32.mxu0 0.0
    %v885 = vand.u32 %v680, 4294901760
    %886 = vmatmul.mubr.f32.gmra.mxu0 %v885
    %v887 = vpop.f32.mrf.mxu0
    %v888 = vadd.f32 %v767, %v887
    %v889 = vpop.f32.mrf.mxu0
    %890 = vmatprep.mubr.f32.mxu0 0.0
    %v891 = vand.u32 %v683, 4294901760
    %892 = vmatmul.mubr.f32.gmra.mxu0 %v891
    %v893 = vpop.f32.mrf.mxu0
    %v894 = vadd.f32 %v777, %v893
    %v895 = vpop.f32.mrf.mxu0
    %896 = vmatprep.mubr.f32.mxu0 0.0
    %v897 = vand.u32 %v686, 4294901760
    %898 = vmatmul.mubr.f32.gmra.mxu0 %v897
    %v899 = vpop.f32.mrf.mxu0
    %v900 = vadd.f32 %v787, %v899
    %v901 = vpop.f32.mrf.mxu0
    %902 = vmatprep.mubr.f32.mxu0 0.0
    %v903 = vand.u32 %v689, 4294901760
    %904 = vmatmul.mubr.f32.gmra.mxu0 %v903
    %v905 = vpop.f32.mrf.mxu0
    %v906 = vadd.f32 %v797, %v905
    %v907 = vpop.f32.mrf.mxu0
    %908 = vdwg.mxu0
    %909 = vmatprep.subr.mxu0 0.0
    %910 = vmatpush1.msra.mxu0 0.0
    %911 = vmatprep.subr.mxu0 0.0
    %912 = vmatpush1.msra.mxu0 0.0
    %913 = vmatprep.subr.mxu0 0.0
    %914 = vmatpush1.msra.mxu0 0.0
    %915 = vmatprep.subr.mxu0 0.0
    %916 = vmatpush1.msra.mxu0 0.0
    %917 = vmatprep.subr.mxu0 0.0
    %918 = vmatpush1.msra.mxu0 0.0
    %919 = vmatprep.subr.mxu0 0.0
    %920 = vmatpush1.msra.mxu0 0.0
    %921 = vmatprep.subr.mxu0 0.0
    %922 = vmatpush1.msra.mxu0 0.0
    %923 = vmatprep.subr.mxu0 0.0
    %924 = vmatpush1.msra.mxu0 0.0
    %925 = vmatprep.subr.mxu0 0.0
    %926 = vmatpush1.msra.mxu0 0.0
    %927 = vmatprep.subr.mxu0 0.0
    %928 = vmatpush1.msra.mxu0 0.0
    %929 = vmatprep.subr.mxu0 0.0
    %930 = vmatpush1.msra.mxu0 0.0
    %931 = vmatprep.subr.mxu0 0.0
    %932 = vmatpush1.msra.mxu0 0.0
    %933 = vmatprep.subr.mxu0 0.0
    %v934 = vand.u32 %v649, 4294901760
    %v935 = vsub.f32 %v649, %v934
    %936 = vmatpush1.msra.mxu0 %v935
    %937 = vmatprep.subr.mxu0 0.0
    %v938 = vand.u32 %v648, 4294901760
    %v939 = vsub.f32 %v648, %v938
    %940 = vmatpush1.msra.mxu0 %v939
    %941 = vmatprep.subr.mxu0 0.0
    %v942 = vand.u32 %v647, 4294901760
    %v943 = vsub.f32 %v647, %v942
    %944 = vmatpush1.msra.mxu0 %v943
    %945 = vmatprep.subr.mxu0 0.0
    %v946 = vand.u32 %v646, 4294901760
    %v947 = vsub.f32 %v646, %v946
    %948 = vmatpush1.msra.mxu0 %v947
    %949 = vmatprep.subr.mxu0 0.0
    %950 = vmatpush2.msra.mxu0 0.0
    %951 = vmatprep.subr.mxu0 0.0
    %952 = vmatpush2.msra.mxu0 0.0
    %953 = vmatprep.subr.mxu0 0.0
    %954 = vmatpush2.msra.mxu0 0.0
    %955 = vmatprep.subr.mxu0 0.0
    %956 = vmatpush2.msra.mxu0 0.0
    %957 = vmatprep.subr.mxu0 0.0
    %958 = vmatpush2.msra.mxu0 0.0
    %959 = vmatprep.subr.mxu0 0.0
    %960 = vmatpush2.msra.mxu0 0.0
    %961 = vmatprep.subr.mxu0 0.0
    %962 = vmatpush2.msra.mxu0 0.0
    %963 = vmatprep.subr.mxu0 0.0
    %964 = vmatpush2.msra.mxu0 0.0
    %965 = vmatprep.subr.mxu0 0.0
    %966 = vmatpush2.msra.mxu0 0.0
    %967 = vmatprep.subr.mxu0 0.0
    %968 = vmatpush2.msra.mxu0 0.0
    %969 = vmatprep.subr.mxu0 0.0
    %970 = vmatpush2.msra.mxu0 0.0
    %971 = vmatprep.subr.mxu0 0.0
    %972 = vmatpush2.msra.mxu0 0.0
    %973 = vmatprep.subr.mxu0 0.0
    %974 = vmatpush2.msra.mxu0 0.0
    %975 = vmatprep.subr.mxu0 0.0
    %976 = vmatpush2.msra.mxu0 0.0
    %977 = vmatprep.subr.mxu0 0.0
    %978 = vmatpush2.msra.mxu0 0.0
    %979 = vmatprep.subr.mxu0 0.0
    %980 = vmatpush2.msra.mxu0 0.0
    %981 = vmatprep.mubr.f32.mxu0 0.0
    %v982 = vand.u32 %v680, 4294901760
    %v983 = vsub.f32 %v680, %v982
    %984 = vmatmul.mubr.f32.gmra.mxu0 %v983
    %v985 = vpop.f32.mrf.mxu0
    %v986 = vadd.f32 %v888, %v985
    %v987 = vpop.f32.mrf.mxu0
    %988 = vmatprep.mubr.f32.mxu0 0.0
    %v989 = vand.u32 %v683, 4294901760
    %v990 = vsub.f32 %v683, %v989
    %991 = vmatmul.mubr.f32.gmra.mxu0 %v990
    %v992 = vpop.f32.mrf.mxu0
    %v993 = vadd.f32 %v894, %v992
    %v994 = vpop.f32.mrf.mxu0
    %995 = vmatprep.mubr.f32.mxu0 0.0
    %v996 = vand.u32 %v686, 4294901760
    %v997 = vsub.f32 %v686, %v996
    %998 = vmatmul.mubr.f32.gmra.mxu0 %v997
    %v999 = vpop.f32.mrf.mxu0
    %v1000 = vadd.f32 %v900, %v999
    %v1001 = vpop.f32.mrf.mxu0
    %1002 = vmatprep.mubr.f32.mxu0 0.0
    %v1003 = vand.u32 %v689, 4294901760
    %v1004 = vsub.f32 %v689, %v1003
    %1005 = vmatmul.mubr.f32.gmra.mxu0 %v1004
    %v1006 = vpop.f32.mrf.mxu0
    %v1007 = vadd.f32 %v906, %v1006
    %v1008 = vpop.f32.mrf.mxu0
    %1009 = vdwg.mxu0
    %1010 = vmatprep.subr.mxu0 0.0
    %1011 = vmatpush1.msra.mxu0 0.0
    %1012 = vmatprep.subr.mxu0 0.0
    %1013 = vmatpush1.msra.mxu0 0.0
    %1014 = vmatprep.subr.mxu0 0.0
    %1015 = vmatpush1.msra.mxu0 0.0
    %1016 = vmatprep.subr.mxu0 0.0
    %1017 = vmatpush1.msra.mxu0 0.0
    %1018 = vmatprep.subr.mxu0 0.0
    %1019 = vmatpush1.msra.mxu0 0.0
    %1020 = vmatprep.subr.mxu0 0.0
    %1021 = vmatpush1.msra.mxu0 0.0
    %1022 = vmatprep.subr.mxu0 0.0
    %1023 = vmatpush1.msra.mxu0 0.0
    %1024 = vmatprep.subr.mxu0 0.0
    %1025 = vmatpush1.msra.mxu0 0.0
    %1026 = vmatprep.subr.mxu0 0.0
    %1027 = vmatpush1.msra.mxu0 0.0
    %1028 = vmatprep.subr.mxu0 0.0
    %1029 = vmatpush1.msra.mxu0 0.0
    %1030 = vmatprep.subr.mxu0 0.0
    %1031 = vmatpush1.msra.mxu0 0.0
    %1032 = vmatprep.subr.mxu0 0.0
    %1033 = vmatpush1.msra.mxu0 0.0
    %1034 = vmatprep.subr.mxu0 0.0
    %v1035 = vand.u32 %v649, 4294901760
    %1036 = vmatpush1.msra.mxu0 %v1035
    %1037 = vmatprep.subr.mxu0 0.0
    %v1038 = vand.u32 %v648, 4294901760
    %1039 = vmatpush1.msra.mxu0 %v1038
    %1040 = vmatprep.subr.mxu0 0.0
    %v1041 = vand.u32 %v647, 4294901760
    %1042 = vmatpush1.msra.mxu0 %v1041
    %1043 = vmatprep.subr.mxu0 0.0
    %v1044 = vand.u32 %v646, 4294901760
    %1045 = vmatpush1.msra.mxu0 %v1044
    %1046 = vmatprep.subr.mxu0 0.0
    %1047 = vmatpush2.msra.mxu0 0.0
    %1048 = vmatprep.subr.mxu0 0.0
    %1049 = vmatpush2.msra.mxu0 0.0
    %1050 = vmatprep.subr.mxu0 0.0
    %1051 = vmatpush2.msra.mxu0 0.0
    %1052 = vmatprep.subr.mxu0 0.0
    %1053 = vmatpush2.msra.mxu0 0.0
    %1054 = vmatprep.subr.mxu0 0.0
    %1055 = vmatpush2.msra.mxu0 0.0
    %1056 = vmatprep.subr.mxu0 0.0
    %1057 = vmatpush2.msra.mxu0 0.0
    %1058 = vmatprep.subr.mxu0 0.0
    %1059 = vmatpush2.msra.mxu0 0.0
    %1060 = vmatprep.subr.mxu0 0.0
    %1061 = vmatpush2.msra.mxu0 0.0
    %1062 = vmatprep.subr.mxu0 0.0
    %1063 = vmatpush2.msra.mxu0 0.0
    %1064 = vmatprep.subr.mxu0 0.0
    %1065 = vmatpush2.msra.mxu0 0.0
    %1066 = vmatprep.subr.mxu0 0.0
    %1067 = vmatpush2.msra.mxu0 0.0
    %1068 = vmatprep.subr.mxu0 0.0
    %1069 = vmatpush2.msra.mxu0 0.0
    %1070 = vmatprep.subr.mxu0 0.0
    %1071 = vmatpush2.msra.mxu0 0.0
    %1072 = vmatprep.subr.mxu0 0.0
    %1073 = vmatpush2.msra.mxu0 0.0
    %1074 = vmatprep.subr.mxu0 0.0
    %1075 = vmatpush2.msra.mxu0 0.0
    %1076 = vmatprep.subr.mxu0 0.0
    %1077 = vmatpush2.msra.mxu0 0.0
    %1078 = vmatprep.mubr.f32.mxu0 0.0
    %v1079 = vand.u32 %v680, 4294901760
    %v1080 = vsub.f32 %v680, %v1079
    %v1081 = vand.u32 %v1080, 4294901760
    %1082 = vmatmul.mubr.f32.gmra.mxu0 %v1081
    %v1083 = vpop.f32.mrf.mxu0
    %v1084 = vadd.f32 %v986, %v1083
    %v1085 = vpop.f32.mrf.mxu0
    %1086 = vmatprep.mubr.f32.mxu0 0.0
    %v1087 = vand.u32 %v683, 4294901760
    %v1088 = vsub.f32 %v683, %v1087
    %v1089 = vand.u32 %v1088, 4294901760
    %1090 = vmatmul.mubr.f32.gmra.mxu0 %v1089
    %v1091 = vpop.f32.mrf.mxu0
    %v1092 = vadd.f32 %v993, %v1091
    %v1093 = vpop.f32.mrf.mxu0
    %1094 = vmatprep.mubr.f32.mxu0 0.0
    %v1095 = vand.u32 %v686, 4294901760
    %v1096 = vsub.f32 %v686, %v1095
    %v1097 = vand.u32 %v1096, 4294901760
    %1098 = vmatmul.mubr.f32.gmra.mxu0 %v1097
    %v1099 = vpop.f32.mrf.mxu0
    %v1100 = vadd.f32 %v1000, %v1099
    %v1101 = vpop.f32.mrf.mxu0
    %1102 = vmatprep.mubr.f32.mxu0 0.0
    %v1103 = vand.u32 %v689, 4294901760
    %v1104 = vsub.f32 %v689, %v1103
    %v1105 = vand.u32 %v1104, 4294901760
    %1106 = vmatmul.mubr.f32.gmra.mxu0 %v1105
    %v1107 = vpop.f32.mrf.mxu0
    %v1108 = vadd.f32 %v1007, %v1107
    %v1109 = vpop.f32.mrf.mxu0
    %1110 = vdwg.mxu0
    %1111 = vmatprep.subr.mxu0 0.0
    %1112 = vmatpush1.msra.mxu0 0.0
    %1113 = vmatprep.subr.mxu0 0.0
    %1114 = vmatpush1.msra.mxu0 0.0
    %1115 = vmatprep.subr.mxu0 0.0
    %1116 = vmatpush1.msra.mxu0 0.0
    %1117 = vmatprep.subr.mxu0 0.0
    %1118 = vmatpush1.msra.mxu0 0.0
    %1119 = vmatprep.subr.mxu0 0.0
    %1120 = vmatpush1.msra.mxu0 0.0
    %1121 = vmatprep.subr.mxu0 0.0
    %1122 = vmatpush1.msra.mxu0 0.0
    %1123 = vmatprep.subr.mxu0 0.0
    %1124 = vmatpush1.msra.mxu0 0.0
    %1125 = vmatprep.subr.mxu0 0.0
    %1126 = vmatpush1.msra.mxu0 0.0
    %1127 = vmatprep.subr.mxu0 0.0
    %1128 = vmatpush1.msra.mxu0 0.0
    %1129 = vmatprep.subr.mxu0 0.0
    %1130 = vmatpush1.msra.mxu0 0.0
    %1131 = vmatprep.subr.mxu0 0.0
    %1132 = vmatpush1.msra.mxu0 0.0
    %1133 = vmatprep.subr.mxu0 0.0
    %1134 = vmatpush1.msra.mxu0 0.0
    %1135 = vmatprep.subr.mxu0 0.0
    %v1136 = vand.u32 %v649, 4294901760
    %v1137 = vsub.f32 %v649, %v1136
    %v1138 = vand.u32 %v1137, 4294901760
    %1139 = vmatpush1.msra.mxu0 %v1138
    %1140 = vmatprep.subr.mxu0 0.0
    %v1141 = vand.u32 %v648, 4294901760
    %v1142 = vsub.f32 %v648, %v1141
    %v1143 = vand.u32 %v1142, 4294901760
    %1144 = vmatpush1.msra.mxu0 %v1143
    %1145 = vmatprep.subr.mxu0 0.0
    %v1146 = vand.u32 %v647, 4294901760
    %v1147 = vsub.f32 %v647, %v1146
    %v1148 = vand.u32 %v1147, 4294901760
    %1149 = vmatpush1.msra.mxu0 %v1148
    %1150 = vmatprep.subr.mxu0 0.0
    %v1151 = vand.u32 %v646, 4294901760
    %v1152 = vsub.f32 %v646, %v1151
    %v1153 = vand.u32 %v1152, 4294901760
    %1154 = vmatpush1.msra.mxu0 %v1153
    %1155 = vmatprep.subr.mxu0 0.0
    %1156 = vmatpush2.msra.mxu0 0.0
    %1157 = vmatprep.subr.mxu0 0.0
    %1158 = vmatpush2.msra.mxu0 0.0
    %1159 = vmatprep.subr.mxu0 0.0
    %1160 = vmatpush2.msra.mxu0 0.0
    %1161 = vmatprep.subr.mxu0 0.0
    %1162 = vmatpush2.msra.mxu0 0.0
    %1163 = vmatprep.subr.mxu0 0.0
    %1164 = vmatpush2.msra.mxu0 0.0
    %1165 = vmatprep.subr.mxu0 0.0
    %1166 = vmatpush2.msra.mxu0 0.0
    %1167 = vmatprep.subr.mxu0 0.0
    %1168 = vmatpush2.msra.mxu0 0.0
    %1169 = vmatprep.subr.mxu0 0.0
    %1170 = vmatpush2.msra.mxu0 0.0
    %1171 = vmatprep.subr.mxu0 0.0
    %1172 = vmatpush2.msra.mxu0 0.0
    %1173 = vmatprep.subr.mxu0 0.0
    %1174 = vmatpush2.msra.mxu0 0.0
    %1175 = vmatprep.subr.mxu0 0.0
    %1176 = vmatpush2.msra.mxu0 0.0
    %1177 = vmatprep.subr.mxu0 0.0
    %1178 = vmatpush2.msra.mxu0 0.0
    %1179 = vmatprep.subr.mxu0 0.0
    %1180 = vmatpush2.msra.mxu0 0.0
    %1181 = vmatprep.subr.mxu0 0.0
    %1182 = vmatpush2.msra.mxu0 0.0
    %1183 = vmatprep.subr.mxu0 0.0
    %1184 = vmatpush2.msra.mxu0 0.0
    %1185 = vmatprep.subr.mxu0 0.0
    %1186 = vmatpush2.msra.mxu0 0.0
    %1187 = vmatprep.mubr.f32.mxu0 0.0
    %v1188 = vand.u32 %v680, 4294901760
    %1189 = vmatmul.mubr.f32.gmra.mxu0 %v1188
    %v1190 = vpop.f32.mrf.mxu0
    %v1191 = vadd.f32 %v1084, %v1190
    %v1192 = vpop.f32.mrf.mxu0
    %1193 = vmatprep.mubr.f32.mxu0 0.0
    %v1194 = vand.u32 %v683, 4294901760
    %1195 = vmatmul.mubr.f32.gmra.mxu0 %v1194
    %v1196 = vpop.f32.mrf.mxu0
    %v1197 = vadd.f32 %v1092, %v1196
    %v1198 = vpop.f32.mrf.mxu0
    %1199 = vmatprep.mubr.f32.mxu0 0.0
    %v1200 = vand.u32 %v686, 4294901760
    %1201 = vmatmul.mubr.f32.gmra.mxu0 %v1200
    %v1202 = vpop.f32.mrf.mxu0
    %v1203 = vadd.f32 %v1100, %v1202
    %v1204 = vpop.f32.mrf.mxu0
    %1205 = vmatprep.mubr.f32.mxu0 0.0
    %v1206 = vand.u32 %v689, 4294901760
    %1207 = vmatmul.mubr.f32.gmra.mxu0 %v1206
    %v1208 = vpop.f32.mrf.mxu0
    %v1209 = vadd.f32 %v1108, %v1208
    %v1210 = vpop.f32.mrf.mxu0
    %1211 = vdwg.mxu0
    %1212 = vmatprep.subr.mxu0 0.0
    %1213 = vmatpush1.msra.mxu0 0.0
    %1214 = vmatprep.subr.mxu0 0.0
    %1215 = vmatpush1.msra.mxu0 0.0
    %1216 = vmatprep.subr.mxu0 0.0
    %1217 = vmatpush1.msra.mxu0 0.0
    %1218 = vmatprep.subr.mxu0 0.0
    %1219 = vmatpush1.msra.mxu0 0.0
    %1220 = vmatprep.subr.mxu0 0.0
    %1221 = vmatpush1.msra.mxu0 0.0
    %1222 = vmatprep.subr.mxu0 0.0
    %1223 = vmatpush1.msra.mxu0 0.0
    %1224 = vmatprep.subr.mxu0 0.0
    %1225 = vmatpush1.msra.mxu0 0.0
    %1226 = vmatprep.subr.mxu0 0.0
    %1227 = vmatpush1.msra.mxu0 0.0
    %1228 = vmatprep.subr.mxu0 0.0
    %1229 = vmatpush1.msra.mxu0 0.0
    %1230 = vmatprep.subr.mxu0 0.0
    %1231 = vmatpush1.msra.mxu0 0.0
    %1232 = vmatprep.subr.mxu0 0.0
    %1233 = vmatpush1.msra.mxu0 0.0
    %1234 = vmatprep.subr.mxu0 0.0
    %1235 = vmatpush1.msra.mxu0 0.0
    %1236 = vmatprep.subr.mxu0 0.0
    %v1237 = vand.u32 %v649, 4294901760
    %1238 = vmatpush1.msra.mxu0 %v1237
    %1239 = vmatprep.subr.mxu0 0.0
    %v1240 = vand.u32 %v648, 4294901760
    %1241 = vmatpush1.msra.mxu0 %v1240
    %1242 = vmatprep.subr.mxu0 0.0
    %v1243 = vand.u32 %v647, 4294901760
    %1244 = vmatpush1.msra.mxu0 %v1243
    %1245 = vmatprep.subr.mxu0 0.0
    %v1246 = vand.u32 %v646, 4294901760
    %1247 = vmatpush1.msra.mxu0 %v1246
    %1248 = vmatprep.subr.mxu0 0.0
    %1249 = vmatpush2.msra.mxu0 0.0
    %1250 = vmatprep.subr.mxu0 0.0
    %1251 = vmatpush2.msra.mxu0 0.0
    %1252 = vmatprep.subr.mxu0 0.0
    %1253 = vmatpush2.msra.mxu0 0.0
    %1254 = vmatprep.subr.mxu0 0.0
    %1255 = vmatpush2.msra.mxu0 0.0
    %1256 = vmatprep.subr.mxu0 0.0
    %1257 = vmatpush2.msra.mxu0 0.0
    %1258 = vmatprep.subr.mxu0 0.0
    %1259 = vmatpush2.msra.mxu0 0.0
    %1260 = vmatprep.subr.mxu0 0.0
    %1261 = vmatpush2.msra.mxu0 0.0
    %1262 = vmatprep.subr.mxu0 0.0
    %1263 = vmatpush2.msra.mxu0 0.0
    %1264 = vmatprep.subr.mxu0 0.0
    %1265 = vmatpush2.msra.mxu0 0.0
    %1266 = vmatprep.subr.mxu0 0.0
    %1267 = vmatpush2.msra.mxu0 0.0
    %1268 = vmatprep.subr.mxu0 0.0
    %1269 = vmatpush2.msra.mxu0 0.0
    %1270 = vmatprep.subr.mxu0 0.0
    %1271 = vmatpush2.msra.mxu0 0.0
    %1272 = vmatprep.subr.mxu0 0.0
    %1273 = vmatpush2.msra.mxu0 0.0
    %1274 = vmatprep.subr.mxu0 0.0
    %1275 = vmatpush2.msra.mxu0 0.0
    %1276 = vmatprep.subr.mxu0 0.0
    %1277 = vmatpush2.msra.mxu0 0.0
    %1278 = vmatprep.subr.mxu0 0.0
    %1279 = vmatpush2.msra.mxu0 0.0
    %1280 = vmatprep.mubr.f32.mxu0 0.0
    %v1281 = vand.u32 %v680, 4294901760
    %1282 = vmatmul.mubr.f32.gmra.mxu0 %v1281
    %v1283 = vpop.f32.mrf.mxu0
    %v1284 = vadd.f32 %v1191, %v1283
    %v1285 = vpop.f32.mrf.mxu0
    %1286 = vmatprep.mubr.f32.mxu0 0.0
    %v1287 = vand.u32 %v683, 4294901760
    %1288 = vmatmul.mubr.f32.gmra.mxu0 %v1287
    %v1289 = vpop.f32.mrf.mxu0
    %v1290 = vadd.f32 %v1197, %v1289
    %v1291 = vpop.f32.mrf.mxu0
    %1292 = vmatprep.mubr.f32.mxu0 0.0
    %v1293 = vand.u32 %v686, 4294901760
    %1294 = vmatmul.mubr.f32.gmra.mxu0 %v1293
    %v1295 = vpop.f32.mrf.mxu0
    %v1296 = vadd.f32 %v1203, %v1295
    %v1297 = vpop.f32.mrf.mxu0
    %1298 = vmatprep.mubr.f32.mxu0 0.0
    %v1299 = vand.u32 %v689, 4294901760
    %1300 = vmatmul.mubr.f32.gmra.mxu0 %v1299
    %v1301 = vpop.f32.mrf.mxu0
    %v1302 = vadd.f32 %v1209, %v1301
    %v1303 = vpop.f32.mrf.mxu0
    %1304 = vdwg.mxu0
    %v1305 = vmax.f32 %v1284, 0.0
    %v1306 = vmax.f32 %v1290, 0.0
    %v1307 = vmax.f32 %v1296, 0.0
    %v1308 = vmax.f32 %v1302, 0.0
    %v1309 = vld [vmem:[%s5] sm:$0xf]
    %v1310 = vld [vmem:[%s6] sm:$0xf]
    %1312 = vset.pattern.permute.xlu0 0
    %1313 = vperm.xlu0 %1312, %v1310
    %v1314 = vpop.permute.xlu0 %1313
    %v1317 = vsel %vm678, %v1309, 0
    %1319 = vmatprep.subr.mxu0 0.0
    %1320 = vmatpush1.msra.mxu0 0.0
    %1321 = vmatprep.subr.mxu0 0.0
    %1322 = vmatpush1.msra.mxu0 0.0
    %1323 = vmatprep.subr.mxu0 0.0
    %1324 = vmatpush1.msra.mxu0 0.0
    %1325 = vmatprep.subr.mxu0 0.0
    %1326 = vmatpush1.msra.mxu0 0.0
    %1327 = vmatprep.subr.mxu0 0.0
    %1328 = vmatpush1.msra.mxu0 0.0
    %1329 = vmatprep.subr.mxu0 0.0
    %1330 = vmatpush1.msra.mxu0 0.0
    %1331 = vmatprep.subr.mxu0 0.0
    %1332 = vmatpush1.msra.mxu0 0.0
    %1333 = vmatprep.subr.mxu0 0.0
    %1334 = vmatpush1.msra.mxu0 0.0
    %1335 = vmatprep.subr.mxu0 0.0
    %1336 = vmatpush1.msra.mxu0 0.0
    %1337 = vmatprep.subr.mxu0 0.0
    %1338 = vmatpush1.msra.mxu0 0.0
    %1339 = vmatprep.subr.mxu0 0.0
    %1340 = vmatpush1.msra.mxu0 0.0
    %1341 = vmatprep.subr.mxu0 0.0
    %1342 = vmatpush1.msra.mxu0 0.0
    %1343 = vmatprep.subr.mxu0 0.0
    %v1344 = vand.u32 %v1308, 4294901760
    %1345 = vmatpush1.msra.mxu0 %v1344
    %1346 = vmatprep.subr.mxu0 0.0
    %v1347 = vand.u32 %v1307, 4294901760
    %1348 = vmatpush1.msra.mxu0 %v1347
    %1349 = vmatprep.subr.mxu0 0.0
    %v1350 = vand.u32 %v1306, 4294901760
    %1351 = vmatpush1.msra.mxu0 %v1350
    %1352 = vmatprep.subr.mxu0 0.0
    %v1353 = vand.u32 %v1305, 4294901760
    %1354 = vmatpush1.msra.mxu0 %v1353
    %1355 = vmatprep.subr.mxu0 0.0
    %1356 = vmatpush2.msra.mxu0 0.0
    %1357 = vmatprep.subr.mxu0 0.0
    %1358 = vmatpush2.msra.mxu0 0.0
    %1359 = vmatprep.subr.mxu0 0.0
    %1360 = vmatpush2.msra.mxu0 0.0
    %1361 = vmatprep.subr.mxu0 0.0
    %1362 = vmatpush2.msra.mxu0 0.0
    %1363 = vmatprep.subr.mxu0 0.0
    %1364 = vmatpush2.msra.mxu0 0.0
    %1365 = vmatprep.subr.mxu0 0.0
    %1366 = vmatpush2.msra.mxu0 0.0
    %1367 = vmatprep.subr.mxu0 0.0
    %1368 = vmatpush2.msra.mxu0 0.0
    %1369 = vmatprep.subr.mxu0 0.0
    %1370 = vmatpush2.msra.mxu0 0.0
    %1371 = vmatprep.subr.mxu0 0.0
    %1372 = vmatpush2.msra.mxu0 0.0
    %1373 = vmatprep.subr.mxu0 0.0
    %1374 = vmatpush2.msra.mxu0 0.0
    %1375 = vmatprep.subr.mxu0 0.0
    %1376 = vmatpush2.msra.mxu0 0.0
    %1377 = vmatprep.subr.mxu0 0.0
    %1378 = vmatpush2.msra.mxu0 0.0
    %1379 = vmatprep.subr.mxu0 0.0
    %1380 = vmatpush2.msra.mxu0 0.0
    %1381 = vmatprep.subr.mxu0 0.0
    %1382 = vmatpush2.msra.mxu0 0.0
    %1383 = vmatprep.subr.mxu0 0.0
    %1384 = vmatpush2.msra.mxu0 0.0
    %1385 = vmatprep.subr.mxu0 0.0
    %1386 = vmatpush2.msra.mxu0 0.0
    %1387 = vmatprep.mubr.f32.mxu0 0.0
    %v1388 = vand.u32 %v1317, 4294901760
    %v1389 = vsub.f32 %v1317, %v1388
    %v1390 = vand.u32 %v1389, 4294901760
    %v1391 = vsub.f32 %v1389, %v1390
    %v1392 = vand.u32 %v1391, 4294901760
    %1393 = vmatmul.mubr.f32.gmra.mxu0 %v1392
    %v1394 = vpop.f32.mrf.mxu0
    %v1395 = vadd.f32 %v1314, %v1394
    %v1396 = vpop.f32.mrf.mxu0
    %1397 = vdwg.mxu0
    %1398 = vmatprep.subr.mxu0 0.0
    %1399 = vmatpush1.msra.mxu0 0.0
    %1400 = vmatprep.subr.mxu0 0.0
    %1401 = vmatpush1.msra.mxu0 0.0
    %1402 = vmatprep.subr.mxu0 0.0
    %1403 = vmatpush1.msra.mxu0 0.0
    %1404 = vmatprep.subr.mxu0 0.0
    %1405 = vmatpush1.msra.mxu0 0.0
    %1406 = vmatprep.subr.mxu0 0.0
    %1407 = vmatpush1.msra.mxu0 0.0
    %1408 = vmatprep.subr.mxu0 0.0
    %1409 = vmatpush1.msra.mxu0 0.0
    %1410 = vmatprep.subr.mxu0 0.0
    %1411 = vmatpush1.msra.mxu0 0.0
    %1412 = vmatprep.subr.mxu0 0.0
    %1413 = vmatpush1.msra.mxu0 0.0
    %1414 = vmatprep.subr.mxu0 0.0
    %1415 = vmatpush1.msra.mxu0 0.0
    %1416 = vmatprep.subr.mxu0 0.0
    %1417 = vmatpush1.msra.mxu0 0.0
    %1418 = vmatprep.subr.mxu0 0.0
    %1419 = vmatpush1.msra.mxu0 0.0
    %1420 = vmatprep.subr.mxu0 0.0
    %1421 = vmatpush1.msra.mxu0 0.0
    %1422 = vmatprep.subr.mxu0 0.0
    %v1423 = vand.u32 %v1308, 4294901760
    %v1424 = vsub.f32 %v1308, %v1423
    %v1425 = vand.u32 %v1424, 4294901760
    %v1426 = vsub.f32 %v1424, %v1425
    %v1427 = vand.u32 %v1426, 4294901760
    %1428 = vmatpush1.msra.mxu0 %v1427
    %1429 = vmatprep.subr.mxu0 0.0
    %v1430 = vand.u32 %v1307, 4294901760
    %v1431 = vsub.f32 %v1307, %v1430
    %v1432 = vand.u32 %v1431, 4294901760
    %v1433 = vsub.f32 %v1431, %v1432
    %v1434 = vand.u32 %v1433, 4294901760
    %1435 = vmatpush1.msra.mxu0 %v1434
    %1436 = vmatprep.subr.mxu0 0.0
    %v1437 = vand.u32 %v1306, 4294901760
    %v1438 = vsub.f32 %v1306, %v1437
    %v1439 = vand.u32 %v1438, 4294901760
    %v1440 = vsub.f32 %v1438, %v1439
    %v1441 = vand.u32 %v1440, 4294901760
    %1442 = vmatpush1.msra.mxu0 %v1441
    %1443 = vmatprep.subr.mxu0 0.0
    %v1444 = vand.u32 %v1305, 4294901760
    %v1445 = vsub.f32 %v1305, %v1444
    %v1446 = vand.u32 %v1445, 4294901760
    %v1447 = vsub.f32 %v1445, %v1446
    %v1448 = vand.u32 %v1447, 4294901760
    %1449 = vmatpush1.msra.mxu0 %v1448
    %1450 = vmatprep.subr.mxu0 0.0
    %1451 = vmatpush2.msra.mxu0 0.0
    %1452 = vmatprep.subr.mxu0 0.0
    %1453 = vmatpush2.msra.mxu0 0.0
    %1454 = vmatprep.subr.mxu0 0.0
    %1455 = vmatpush2.msra.mxu0 0.0
    %1456 = vmatprep.subr.mxu0 0.0
    %1457 = vmatpush2.msra.mxu0 0.0
    %1458 = vmatprep.subr.mxu0 0.0
    %1459 = vmatpush2.msra.mxu0 0.0
    %1460 = vmatprep.subr.mxu0 0.0
    %1461 = vmatpush2.msra.mxu0 0.0
    %1462 = vmatprep.subr.mxu0 0.0
    %1463 = vmatpush2.msra.mxu0 0.0
    %1464 = vmatprep.subr.mxu0 0.0
    %1465 = vmatpush2.msra.mxu0 0.0
    %1466 = vmatprep.subr.mxu0 0.0
    %1467 = vmatpush2.msra.mxu0 0.0
    %1468 = vmatprep.subr.mxu0 0.0
    %1469 = vmatpush2.msra.mxu0 0.0
    %1470 = vmatprep.subr.mxu0 0.0
    %1471 = vmatpush2.msra.mxu0 0.0
    %1472 = vmatprep.subr.mxu0 0.0
    %1473 = vmatpush2.msra.mxu0 0.0
    %1474 = vmatprep.subr.mxu0 0.0
    %1475 = vmatpush2.msra.mxu0 0.0
    %1476 = vmatprep.subr.mxu0 0.0
    %1477 = vmatpush2.msra.mxu0 0.0
    %1478 = vmatprep.subr.mxu0 0.0
    %1479 = vmatpush2.msra.mxu0 0.0
    %1480 = vmatprep.subr.mxu0 0.0
    %1481 = vmatpush2.msra.mxu0 0.0
    %1482 = vmatprep.mubr.f32.mxu0 0.0
    %v1483 = vand.u32 %v1317, 4294901760
    %1484 = vmatmul.mubr.f32.gmra.mxu0 %v1483
    %v1485 = vpop.f32.mrf.mxu0
    %v1486 = vadd.f32 %v1395, %v1485
    %v1487 = vpop.f32.mrf.mxu0
    %1488 = vdwg.mxu0
    %1489 = vmatprep.subr.mxu0 0.0
    %1490 = vmatpush1.msra.mxu0 0.0
    %1491 = vmatprep.subr.mxu0 0.0
    %1492 = vmatpush1.msra.mxu0 0.0
    %1493 = vmatprep.subr.mxu0 0.0
    %1494 = vmatpush1.msra.mxu0 0.0
    %1495 = vmatprep.subr.mxu0 0.0
    %1496 = vmatpush1.msra.mxu0 0.0
    %1497 = vmatprep.subr.mxu0 0.0
    %1498 = vmatpush1.msra.mxu0 0.0
    %1499 = vmatprep.subr.mxu0 0.0
    %1500 = vmatpush1.msra.mxu0 0.0
    %1501 = vmatprep.subr.mxu0 0.0
    %1502 = vmatpush1.msra.mxu0 0.0
    %1503 = vmatprep.subr.mxu0 0.0
    %1504 = vmatpush1.msra.mxu0 0.0
    %1505 = vmatprep.subr.mxu0 0.0
    %1506 = vmatpush1.msra.mxu0 0.0
    %1507 = vmatprep.subr.mxu0 0.0
    %1508 = vmatpush1.msra.mxu0 0.0
    %1509 = vmatprep.subr.mxu0 0.0
    %1510 = vmatpush1.msra.mxu0 0.0
    %1511 = vmatprep.subr.mxu0 0.0
    %1512 = vmatpush1.msra.mxu0 0.0
    %1513 = vmatprep.subr.mxu0 0.0
    %v1514 = vand.u32 %v1308, 4294901760
    %v1515 = vsub.f32 %v1308, %v1514
    %1516 = vmatpush1.msra.mxu0 %v1515
    %1517 = vmatprep.subr.mxu0 0.0
    %v1518 = vand.u32 %v1307, 4294901760
    %v1519 = vsub.f32 %v1307, %v1518
    %1520 = vmatpush1.msra.mxu0 %v1519
    %1521 = vmatprep.subr.mxu0 0.0
    %v1522 = vand.u32 %v1306, 4294901760
    %v1523 = vsub.f32 %v1306, %v1522
    %1524 = vmatpush1.msra.mxu0 %v1523
    %1525 = vmatprep.subr.mxu0 0.0
    %v1526 = vand.u32 %v1305, 4294901760
    %v1527 = vsub.f32 %v1305, %v1526
    %1528 = vmatpush1.msra.mxu0 %v1527
    %1529 = vmatprep.subr.mxu0 0.0
    %1530 = vmatpush2.msra.mxu0 0.0
    %1531 = vmatprep.subr.mxu0 0.0
    %1532 = vmatpush2.msra.mxu0 0.0
    %1533 = vmatprep.subr.mxu0 0.0
    %1534 = vmatpush2.msra.mxu0 0.0
    %1535 = vmatprep.subr.mxu0 0.0
    %1536 = vmatpush2.msra.mxu0 0.0
    %1537 = vmatprep.subr.mxu0 0.0
    %1538 = vmatpush2.msra.mxu0 0.0
    %1539 = vmatprep.subr.mxu0 0.0
    %1540 = vmatpush2.msra.mxu0 0.0
    %1541 = vmatprep.subr.mxu0 0.0
    %1542 = vmatpush2.msra.mxu0 0.0
    %1543 = vmatprep.subr.mxu0 0.0
    %1544 = vmatpush2.msra.mxu0 0.0
    %1545 = vmatprep.subr.mxu0 0.0
    %1546 = vmatpush2.msra.mxu0 0.0
    %1547 = vmatprep.subr.mxu0 0.0
    %1548 = vmatpush2.msra.mxu0 0.0
    %1549 = vmatprep.subr.mxu0 0.0
    %1550 = vmatpush2.msra.mxu0 0.0
    %1551 = vmatprep.subr.mxu0 0.0
    %1552 = vmatpush2.msra.mxu0 0.0
    %1553 = vmatprep.subr.mxu0 0.0
    %1554 = vmatpush2.msra.mxu0 0.0
    %1555 = vmatprep.subr.mxu0 0.0
    %1556 = vmatpush2.msra.mxu0 0.0
    %1557 = vmatprep.subr.mxu0 0.0
    %1558 = vmatpush2.msra.mxu0 0.0
    %1559 = vmatprep.subr.mxu0 0.0
    %1560 = vmatpush2.msra.mxu0 0.0
    %1561 = vmatprep.mubr.f32.mxu0 0.0
    %v1562 = vand.u32 %v1317, 4294901760
    %v1563 = vsub.f32 %v1317, %v1562
    %1564 = vmatmul.mubr.f32.gmra.mxu0 %v1563
    %v1565 = vpop.f32.mrf.mxu0
    %v1566 = vadd.f32 %v1486, %v1565
    %v1567 = vpop.f32.mrf.mxu0
    %1568 = vdwg.mxu0
    %1569 = vmatprep.subr.mxu0 0.0
    %1570 = vmatpush1.msra.mxu0 0.0
    %1571 = vmatprep.subr.mxu0 0.0
    %1572 = vmatpush1.msra.mxu0 0.0
    %1573 = vmatprep.subr.mxu0 0.0
    %1574 = vmatpush1.msra.mxu0 0.0
    %1575 = vmatprep.subr.mxu0 0.0
    %1576 = vmatpush1.msra.mxu0 0.0
    %1577 = vmatprep.subr.mxu0 0.0
    %1578 = vmatpush1.msra.mxu0 0.0
    %1579 = vmatprep.subr.mxu0 0.0
    %1580 = vmatpush1.msra.mxu0 0.0
    %1581 = vmatprep.subr.mxu0 0.0
    %1582 = vmatpush1.msra.mxu0 0.0
    %1583 = vmatprep.subr.mxu0 0.0
    %1584 = vmatpush1.msra.mxu0 0.0
    %1585 = vmatprep.subr.mxu0 0.0
    %1586 = vmatpush1.msra.mxu0 0.0
    %1587 = vmatprep.subr.mxu0 0.0
    %1588 = vmatpush1.msra.mxu0 0.0
    %1589 = vmatprep.subr.mxu0 0.0
    %1590 = vmatpush1.msra.mxu0 0.0
    %1591 = vmatprep.subr.mxu0 0.0
    %1592 = vmatpush1.msra.mxu0 0.0
    %1593 = vmatprep.subr.mxu0 0.0
    %v1594 = vand.u32 %v1308, 4294901760
    %1595 = vmatpush1.msra.mxu0 %v1594
    %1596 = vmatprep.subr.mxu0 0.0
    %v1597 = vand.u32 %v1307, 4294901760
    %1598 = vmatpush1.msra.mxu0 %v1597
    %1599 = vmatprep.subr.mxu0 0.0
    %v1600 = vand.u32 %v1306, 4294901760
    %1601 = vmatpush1.msra.mxu0 %v1600
    %1602 = vmatprep.subr.mxu0 0.0
    %v1603 = vand.u32 %v1305, 4294901760
    %1604 = vmatpush1.msra.mxu0 %v1603
    %1605 = vmatprep.subr.mxu0 0.0
    %1606 = vmatpush2.msra.mxu0 0.0
    %1607 = vmatprep.subr.mxu0 0.0
    %1608 = vmatpush2.msra.mxu0 0.0
    %1609 = vmatprep.subr.mxu0 0.0
    %1610 = vmatpush2.msra.mxu0 0.0
    %1611 = vmatprep.subr.mxu0 0.0
    %1612 = vmatpush2.msra.mxu0 0.0
    %1613 = vmatprep.subr.mxu0 0.0
    %1614 = vmatpush2.msra.mxu0 0.0
    %1615 = vmatprep.subr.mxu0 0.0
    %1616 = vmatpush2.msra.mxu0 0.0
    %1617 = vmatprep.subr.mxu0 0.0
    %1618 = vmatpush2.msra.mxu0 0.0
    %1619 = vmatprep.subr.mxu0 0.0
    %1620 = vmatpush2.msra.mxu0 0.0
    %1621 = vmatprep.subr.mxu0 0.0
    %1622 = vmatpush2.msra.mxu0 0.0
    %1623 = vmatprep.subr.mxu0 0.0
    %1624 = vmatpush2.msra.mxu0 0.0
    %1625 = vmatprep.subr.mxu0 0.0
    %1626 = vmatpush2.msra.mxu0 0.0
    %1627 = vmatprep.subr.mxu0 0.0
    %1628 = vmatpush2.msra.mxu0 0.0
    %1629 = vmatprep.subr.mxu0 0.0
    %1630 = vmatpush2.msra.mxu0 0.0
    %1631 = vmatprep.subr.mxu0 0.0
    %1632 = vmatpush2.msra.mxu0 0.0
    %1633 = vmatprep.subr.mxu0 0.0
    %1634 = vmatpush2.msra.mxu0 0.0
    %1635 = vmatprep.subr.mxu0 0.0
    %1636 = vmatpush2.msra.mxu0 0.0
    %1637 = vmatprep.mubr.f32.mxu0 0.0
    %v1638 = vand.u32 %v1317, 4294901760
    %v1639 = vsub.f32 %v1317, %v1638
    %v1640 = vand.u32 %v1639, 4294901760
    %1641 = vmatmul.mubr.f32.gmra.mxu0 %v1640
    %v1642 = vpop.f32.mrf.mxu0
    %v1643 = vadd.f32 %v1566, %v1642
    %v1644 = vpop.f32.mrf.mxu0
    %1645 = vdwg.mxu0
    %1646 = vmatprep.subr.mxu0 0.0
    %1647 = vmatpush1.msra.mxu0 0.0
    %1648 = vmatprep.subr.mxu0 0.0
    %1649 = vmatpush1.msra.mxu0 0.0
    %1650 = vmatprep.subr.mxu0 0.0
    %1651 = vmatpush1.msra.mxu0 0.0
    %1652 = vmatprep.subr.mxu0 0.0
    %1653 = vmatpush1.msra.mxu0 0.0
    %1654 = vmatprep.subr.mxu0 0.0
    %1655 = vmatpush1.msra.mxu0 0.0
    %1656 = vmatprep.subr.mxu0 0.0
    %1657 = vmatpush1.msra.mxu0 0.0
    %1658 = vmatprep.subr.mxu0 0.0
    %1659 = vmatpush1.msra.mxu0 0.0
    %1660 = vmatprep.subr.mxu0 0.0
    %1661 = vmatpush1.msra.mxu0 0.0
    %1662 = vmatprep.subr.mxu0 0.0
    %1663 = vmatpush1.msra.mxu0 0.0
    %1664 = vmatprep.subr.mxu0 0.0
    %1665 = vmatpush1.msra.mxu0 0.0
    %1666 = vmatprep.subr.mxu0 0.0
    %1667 = vmatpush1.msra.mxu0 0.0
    %1668 = vmatprep.subr.mxu0 0.0
    %1669 = vmatpush1.msra.mxu0 0.0
    %1670 = vmatprep.subr.mxu0 0.0
    %v1671 = vand.u32 %v1308, 4294901760
    %v1672 = vsub.f32 %v1308, %v1671
    %v1673 = vand.u32 %v1672, 4294901760
    %1674 = vmatpush1.msra.mxu0 %v1673
    %1675 = vmatprep.subr.mxu0 0.0
    %v1676 = vand.u32 %v1307, 4294901760
    %v1677 = vsub.f32 %v1307, %v1676
    %v1678 = vand.u32 %v1677, 4294901760
    %1679 = vmatpush1.msra.mxu0 %v1678
    %1680 = vmatprep.subr.mxu0 0.0
    %v1681 = vand.u32 %v1306, 4294901760
    %v1682 = vsub.f32 %v1306, %v1681
    %v1683 = vand.u32 %v1682, 4294901760
    %1684 = vmatpush1.msra.mxu0 %v1683
    %1685 = vmatprep.subr.mxu0 0.0
    %v1686 = vand.u32 %v1305, 4294901760
    %v1687 = vsub.f32 %v1305, %v1686
    %v1688 = vand.u32 %v1687, 4294901760
    %1689 = vmatpush1.msra.mxu0 %v1688
    %1690 = vmatprep.subr.mxu0 0.0
    %1691 = vmatpush2.msra.mxu0 0.0
    %1692 = vmatprep.subr.mxu0 0.0
    %1693 = vmatpush2.msra.mxu0 0.0
    %1694 = vmatprep.subr.mxu0 0.0
    %1695 = vmatpush2.msra.mxu0 0.0
    %1696 = vmatprep.subr.mxu0 0.0
    %1697 = vmatpush2.msra.mxu0 0.0
    %1698 = vmatprep.subr.mxu0 0.0
    %1699 = vmatpush2.msra.mxu0 0.0
    %1700 = vmatprep.subr.mxu0 0.0
    %1701 = vmatpush2.msra.mxu0 0.0
    %1702 = vmatprep.subr.mxu0 0.0
    %1703 = vmatpush2.msra.mxu0 0.0
    %1704 = vmatprep.subr.mxu0 0.0
    %1705 = vmatpush2.msra.mxu0 0.0
    %1706 = vmatprep.subr.mxu0 0.0
    %1707 = vmatpush2.msra.mxu0 0.0
    %1708 = vmatprep.subr.mxu0 0.0
    %1709 = vmatpush2.msra.mxu0 0.0
    %1710 = vmatprep.subr.mxu0 0.0
    %1711 = vmatpush2.msra.mxu0 0.0
    %1712 = vmatprep.subr.mxu0 0.0
    %1713 = vmatpush2.msra.mxu0 0.0
    %1714 = vmatprep.subr.mxu0 0.0
    %1715 = vmatpush2.msra.mxu0 0.0
    %1716 = vmatprep.subr.mxu0 0.0
    %1717 = vmatpush2.msra.mxu0 0.0
    %1718 = vmatprep.subr.mxu0 0.0
    %1719 = vmatpush2.msra.mxu0 0.0
    %1720 = vmatprep.subr.mxu0 0.0
    %1721 = vmatpush2.msra.mxu0 0.0
    %1722 = vmatprep.mubr.f32.mxu0 0.0
    %v1723 = vand.u32 %v1317, 4294901760
    %1724 = vmatmul.mubr.f32.gmra.mxu0 %v1723
    %v1725 = vpop.f32.mrf.mxu0
    %v1726 = vadd.f32 %v1643, %v1725
    %v1727 = vpop.f32.mrf.mxu0
    %1728 = vdwg.mxu0
    %1729 = vmatprep.subr.mxu0 0.0
    %1730 = vmatpush1.msra.mxu0 0.0
    %1731 = vmatprep.subr.mxu0 0.0
    %1732 = vmatpush1.msra.mxu0 0.0
    %1733 = vmatprep.subr.mxu0 0.0
    %1734 = vmatpush1.msra.mxu0 0.0
    %1735 = vmatprep.subr.mxu0 0.0
    %1736 = vmatpush1.msra.mxu0 0.0
    %1737 = vmatprep.subr.mxu0 0.0
    %1738 = vmatpush1.msra.mxu0 0.0
    %1739 = vmatprep.subr.mxu0 0.0
    %1740 = vmatpush1.msra.mxu0 0.0
    %1741 = vmatprep.subr.mxu0 0.0
    %1742 = vmatpush1.msra.mxu0 0.0
    %1743 = vmatprep.subr.mxu0 0.0
    %1744 = vmatpush1.msra.mxu0 0.0
    %1745 = vmatprep.subr.mxu0 0.0
    %1746 = vmatpush1.msra.mxu0 0.0
    %1747 = vmatprep.subr.mxu0 0.0
    %1748 = vmatpush1.msra.mxu0 0.0
    %1749 = vmatprep.subr.mxu0 0.0
    %1750 = vmatpush1.msra.mxu0 0.0
    %1751 = vmatprep.subr.mxu0 0.0
    %1752 = vmatpush1.msra.mxu0 0.0
    %1753 = vmatprep.subr.mxu0 0.0
    %v1754 = vand.u32 %v1308, 4294901760
    %1755 = vmatpush1.msra.mxu0 %v1754
    %1756 = vmatprep.subr.mxu0 0.0
    %v1757 = vand.u32 %v1307, 4294901760
    %1758 = vmatpush1.msra.mxu0 %v1757
    %1759 = vmatprep.subr.mxu0 0.0
    %v1760 = vand.u32 %v1306, 4294901760
    %1761 = vmatpush1.msra.mxu0 %v1760
    %1762 = vmatprep.subr.mxu0 0.0
    %v1763 = vand.u32 %v1305, 4294901760
    %1764 = vmatpush1.msra.mxu0 %v1763
    %1765 = vmatprep.subr.mxu0 0.0
    %1766 = vmatpush2.msra.mxu0 0.0
    %1767 = vmatprep.subr.mxu0 0.0
    %1768 = vmatpush2.msra.mxu0 0.0
    %1769 = vmatprep.subr.mxu0 0.0
    %1770 = vmatpush2.msra.mxu0 0.0
    %1771 = vmatprep.subr.mxu0 0.0
    %1772 = vmatpush2.msra.mxu0 0.0
    %1773 = vmatprep.subr.mxu0 0.0
    %1774 = vmatpush2.msra.mxu0 0.0
    %1775 = vmatprep.subr.mxu0 0.0
    %1776 = vmatpush2.msra.mxu0 0.0
    %1777 = vmatprep.subr.mxu0 0.0
    %1778 = vmatpush2.msra.mxu0 0.0
    %1779 = vmatprep.subr.mxu0 0.0
    %1780 = vmatpush2.msra.mxu0 0.0
    %1781 = vmatprep.subr.mxu0 0.0
    %1782 = vmatpush2.msra.mxu0 0.0
    %1783 = vmatprep.subr.mxu0 0.0
    %1784 = vmatpush2.msra.mxu0 0.0
    %1785 = vmatprep.subr.mxu0 0.0
    %1786 = vmatpush2.msra.mxu0 0.0
    %1787 = vmatprep.subr.mxu0 0.0
    %1788 = vmatpush2.msra.mxu0 0.0
    %1789 = vmatprep.subr.mxu0 0.0
    %1790 = vmatpush2.msra.mxu0 0.0
    %1791 = vmatprep.subr.mxu0 0.0
    %1792 = vmatpush2.msra.mxu0 0.0
    %1793 = vmatprep.subr.mxu0 0.0
    %1794 = vmatpush2.msra.mxu0 0.0
    %1795 = vmatprep.subr.mxu0 0.0
    %1796 = vmatpush2.msra.mxu0 0.0
    %1797 = vmatprep.mubr.f32.mxu0 0.0
    %v1798 = vand.u32 %v1317, 4294901760
    %1799 = vmatmul.mubr.f32.gmra.mxu0 %v1798
    %v1800 = vpop.f32.mrf.mxu0
    %v1801 = vadd.f32 %v1726, %v1800
    %v1802 = vpop.f32.mrf.mxu0
    %1803 = vdwg.mxu0
    %v1804 = vtanh.pop %v1801
    %v1805 = vmul.f32 %v1804, 2.0
    %1806 = vst [vmem:[#allocation2] sm:$0xf] %v1805
    // Predicated region
    $region30: #{tpu_custom_call.1} parent=1 // pred_check
      _
    $region31: #{tpu_custom_call.1} parent=1 // pred_check_branch
      %1808 = sbr.rel (0) target = $region33
    $region32: #{tpu_custom_call.1} parent=1 // pred_region
      %s1810 = ssub.s32 64, 64
      %1811 = vsyncadd [#allocation3], %s1810
      %s1813 = sshll.u32 [#allocation2], 4
      %s1814 = int_to_ptr.vmem [resolvable:$true] %s1813
      %1816 = dma.vmem_to_hbm [thread:$0]  %s1814, 64, %s7, [#allocation3]
    $region33: #{tpu_custom_call.1} parent=1 // pred_fallthru
      _
    // Predicated region
    $region34: #{tpu_custom_call.1} parent=1 // pred_check
      _
    $region35: #{tpu_custom_call.1} parent=1 // pred_check_branch
      %1818 = sbr.rel (0) target = $region37
    $region36: #{tpu_custom_call.1} parent=1 // pred_region
      %1819 = dma.done [#allocation3], 64
    $region37: #{tpu_custom_call.1} parent=1 // pred_fallthru
      _
    %1820 = vsyncpa [#allocation3], 1

</llo_original>
